<compile_context>
chip_gen: v5e
topology: v5e:2x2
jax: 0.10.0
libtpu: 0.0.40
codegen_flags: <defaults>
</compile_context>

<pallas_src>
import functools

import jax
import jax.numpy as jnp
from jax.experimental import pallas as pl
from jax.experimental.pallas import tpu as pltpu


# ---------------------------------------------------------------------------
# Kernel
# ---------------------------------------------------------------------------
def _make_kernel(in_dim, latent_dim, n_gmm, slab_width, pack_dec):
    # Output width of each (fused) Linear layer, in packed-bias row order.
    widths = (512, 256, 128, latent_dim,   # encoder
              128 + 10,                    # fused decoder-l0 + estimation-l0
              256, 512, in_dim,            # rest of decoder
              n_gmm)                       # estimation-l1

    def kernel(x_ref,
               e1w, e2w, e3w, e4w,         # encoder weights, pre-transposed (in, out), bf16
               ds1w,                       # fused (latent, 138) weight, bf16
               d2w, d3w, d4w,              # decoder weights, bf16
               s2w,                        # estimation weight, bf16
               bias_ref,                   # (9, max_width) packed f32 biases
               slab_ref, *maybe_dec_ref):  # lane-dense output slab (+ dec if wide)
        dec_ref = maybe_dec_ref[0] if maybe_dec_ref else None

        def lin(h, w_ref, row):
            fo = widths[row]
            b = bias_ref[row:row + 1, 0:fo]            # (1, fo) static slice, f32
            # bf16 MXU matmul with f32 accumulation; bias add in f32.
            return jnp.dot(h.astype(jnp.bfloat16), w_ref[...],
                           preferred_element_type=jnp.float32) + b

        x = x_ref[...]
        bt = x.shape[0]

        # ---------------- encoder ----------------
        h = jnp.tanh(lin(x, e1w, 0))
        h = jnp.tanh(lin(h, e2w, 1))
        h = jnp.tanh(lin(h, e3w, 2))
        enc = lin(h, e4w, 3)               # final encoder layer: no activation

        # ---- fused decoder-l0 + estimation-l0 (both consume enc, both Tanh) ----
        hb = jnp.tanh(lin(enc, ds1w, 4))   # (bt, 138)
        h_dec = hb[:, :128]
        h_est = hb[:, 128:138]
        # TODO(synk): nn.Dropout(p=0.5) in train mode is stochastic; implemented
        # as eval-mode identity here (pltpu.prng_seed + stateful_bernoulli would
        # be needed for training parity).

        # ---------------- decoder ----------------
        h = jnp.tanh(lin(h_dec, d2w, 5))
        h = jnp.tanh(lin(h, d3w, 6))
        dec = lin(h, d4w, 7)               # final decoder layer: no activation

        # --------------- estimation / softmax ---------------
        logits = lin(h_est, s2w, 8)
        m = jnp.max(logits, axis=1, keepdims=True)
        e = jnp.exp(logits - m)
        gamma = e * pl.reciprocal(jnp.sum(e, axis=1, keepdims=True), approx=True)

        # Lane-dense output slab: one full-width store + one writeback DMA.
        parts = [enc, gamma]
        used = latent_dim + n_gmm
        if pack_dec:
            parts.append(dec)
            used += in_dim
        if slab_width > used:
            parts.append(jnp.zeros((bt, slab_width - used), jnp.float32))
        slab_ref[...] = jnp.concatenate(parts, axis=1)
        if not pack_dec:
            dec_ref[...] = dec

    return kernel


def _resident_spec(shape):
    """Constant index_map -> block never changes -> stays VMEM-resident.
    Buffered(1) disables double-buffering (nothing to pipeline), halving the
    weight VMEM footprint."""
    idx = lambda i: (0,) * len(shape)
    try:
        return pl.BlockSpec(shape, idx, pipeline_mode=pl.Buffered(1))
    except Exception:  # older JAX without pipeline_mode
        return pl.BlockSpec(shape, idx)


# ---------------------------------------------------------------------------
# Wrapper
# ---------------------------------------------------------------------------
@functools.partial(jax.jit, static_argnames=("latent_dim", "n_gmm", "block_b"))
def autoencoder_gmm_forward(x, weights, bias_pack, *, latent_dim, n_gmm, block_b=256):
    """Returns (enc, dec, z, gamma) exactly like the PyTorch forward()."""
    B, in_dim = x.shape
    bt = min(block_b, B)                   # batch tile (multiple of 8 or == B)
    grid = (pl.cdiv(B, bt),)

    pack_dec = in_dim < 128                # narrow dec -> pack into the slab too
    out_width = latent_dim + n_gmm + (in_dim if pack_dec else 0)
    slab_width = max(128, ((out_width + 127) // 128) * 128)

    kernel = _make_kernel(in_dim, latent_dim, n_gmm, slab_width, pack_dec)

    in_specs = [pl.BlockSpec((bt, in_dim), lambda i: (i, 0))]
    in_specs += [_resident_spec(tuple(w.shape)) for w in weights]
    in_specs += [_resident_spec(tuple(bias_pack.shape))]

    out_specs = [pl.BlockSpec((bt, slab_width), lambda i: (i, 0))]
    out_shape = [jax.ShapeDtypeStruct((B, slab_width), jnp.float32)]
    if not pack_dec:
        out_specs.append(pl.BlockSpec((bt, in_dim), lambda i: (i, 0)))
        out_shape.append(jax.ShapeDtypeStruct((B, in_dim), jnp.float32))

    # --- VMEM budget: params counted once (single-buffered), capacity-aware cap.
    param_bytes = sum(int(w.size) * w.dtype.itemsize for w in weights)
    param_bytes += int(bias_pack.size) * bias_pack.dtype.itemsize
    io_bytes = 2 * bt * in_dim * 4                 # x, double-buffered
    io_bytes += 2 * bt * slab_width * 4            # slab out, double-buffered
    if not pack_dec:
        io_bytes += 2 * bt * in_dim * 4
    act_bytes = 24 * bt * max(512, in_dim) * 4     # activations / bf16 copies
    need = param_bytes + io_bytes + act_bytes + (16 << 20)
    try:
        cap = int(0.85 * getattr(pltpu.get_tpu_info(), "vmem_capacity_bytes",
                                 64 << 20))
    except Exception:
        cap = int(0.85 * (64 << 20))               # be safe for v7x (64 MiB)
    vmem_limit = int(min(cap, need))

    # --- Advisory cost estimate so XLA schedules surrounding HLO correctly.
    layer_fi_fo = [(in_dim, 512), (512, 256), (256, 128), (128, latent_dim),
                   (latent_dim, 138), (128, 256), (256, 512), (512, in_dim),
                   (10, n_gmm)]
    flops = 2 * B * sum(fi * fo for fi, fo in layer_fi_fo)
    transcendentals = B * (512 + 256 + 128 + 138 + n_gmm + 1)
    bytes_accessed = int(x.size * 4
                         + sum(int(w.size) * w.dtype.itemsize for w in weights)
                         + int(bias_pack.size) * 4
                         + B * slab_width * 4
                         + (0 if pack_dec else B * in_dim * 4))
    cost = pl.CostEstimate(flops=flops, transcendentals=transcendentals,
                           bytes_accessed=bytes_accessed)

    outs = pl.pallas_call(
        kernel,
        grid=grid,
        in_specs=in_specs,
        out_specs=tuple(out_specs),
        out_shape=tuple(out_shape),
        compiler_params=pltpu.CompilerParams(
            # Batch axis is independent across tiles; splits across TCs where
            # supported (v7x).  pltpu.CORE_PARALLEL is an option if xprof shows
            # a TC idle.
            dimension_semantics=("parallel",),
            vmem_limit_bytes=vmem_limit,
        ),
        cost_estimate=cost,
    )(x, *weights, bias_pack)

    slab = outs[0]
    enc = slab[:, :latent_dim]
    gamma = slab[:, latent_dim:latent_dim + n_gmm]
    dec = slab[:, latent_dim + n_gmm:out_width] if pack_dec else outs[1]
    z = enc
    return enc, dec, z, gamma


# ---------------------------------------------------------------------------
# Parameter construction / packing helpers
# ---------------------------------------------------------------------------
def layer_dims(in_dim, latent_dim, n_gmm):
    return [(in_dim, 512), (512, 256), (256, 128), (128, latent_dim),
            (latent_dim, 128), (128, 256), (256, 512), (512, in_dim),
            (latent_dim, 10), (10, n_gmm)]


def init_params(key, in_dim, latent_dim, n_gmm):
    """PyTorch-style Linear init; weights stored pre-transposed as (in, out)."""
    dims = layer_dims(in_dim, latent_dim, n_gmm)
    keys = jax.random.split(key, len(dims))
    weights, biases = [], []
    for k, (fi, fo) in zip(keys, dims):
        kw, kb = jax.random.split(k)
        bound = 1.0 / jnp.sqrt(jnp.float32(fi))
        weights.append(jax.random.uniform(kw, (fi, fo), jnp.float32, -bound, bound))
        biases.append(jax.random.uniform(kb, (fo,), jnp.float32, -bound, bound))
    return weights, biases


def prepare_params(weights, biases, param_dtype=jnp.bfloat16):
    """Fuse decoder-l0 + estimation-l0, cast weights to bf16, pack biases."""
    e1w, e2w, e3w, e4w, d1w, d2w, d3w, d4w, s1w, s2w = weights
    b_e1, b_e2, b_e3, b_e4, b_d1, b_d2, b_d3, b_d4, b_s1, b_s2 = biases
    ds1w = jnp.concatenate([d1w, s1w], axis=1)          # (latent, 128+10)
    b_ds1 = jnp.concatenate([b_d1, b_s1], axis=0)       # (138,)
    k_weights = [e1w, e2w, e3w, e4w, ds1w, d2w, d3w, d4w, s2w]
    k_weights = tuple(w.astype(param_dtype) for w in k_weights)
    k_biases = [b_e1, b_e2, b_e3, b_e4, b_ds1, b_d2, b_d3, b_d4, b_s2]
    max_w = max(int(b.shape[0]) for b in k_biases)
    bias_pack = jnp.stack(
        [jnp.pad(b, (0, max_w - b.shape[0])) for b in k_biases]).astype(jnp.float32)
    return k_weights, bias_pack                          # (9, max_w)


# ---------------------------------------------------------------------------
# Pure-JAX f32 reference mirroring the PyTorch forward
# ---------------------------------------------------------------------------
def reference_forward(x, weights, biases):
    def lin(h, w, b):
        return h @ w + b
    h = jnp.tanh(lin(x, weights[0], biases[0]))
    h = jnp.tanh(lin(h, weights[1], biases[1]))
    h = jnp.tanh(lin(h, weights[2], biases[2]))
    enc = lin(h, weights[3], biases[3])
    h = jnp.tanh(lin(enc, weights[4], biases[4]))
    h = jnp.tanh(lin(h, weights[5], biases[5]))
    h = jnp.tanh(lin(h, weights[6], biases[6]))
    dec = lin(h, weights[7], biases[7])
    h = jnp.tanh(lin(enc, weights[8], biases[8]))        # Dropout = identity (eval)
    gamma = jax.nn.softmax(lin(h, weights[9], biases[9]), axis=1)
    return enc, dec, enc, gamma


if __name__ == "__main__":
    B, IN_DIM, LATENT, N_GMM = 8, 32, 2, 5

    key = jax.random.PRNGKey(0)
    kx, kp = jax.random.split(key)
    x = jax.random.normal(kx, (B, IN_DIM), jnp.float32)

    weights_f32, biases_f32 = init_params(kp, IN_DIM, LATENT, N_GMM)
    kernel_weights, bias_pack = prepare_params(weights_f32, biases_f32)

    enc, dec, z, gamma = autoencoder_gmm_forward(
        x, kernel_weights, bias_pack, latent_dim=LATENT, n_gmm=N_GMM)
    jax.block_until_ready((enc, dec, z, gamma))

    enc_r, dec_r, z_r, gamma_r = reference_forward(x, weights_f32, biases_f32)

    assert enc.shape == (B, LATENT)
    assert dec.shape == (B, IN_DIM)
    assert z.shape == (B, LATENT)
    assert gamma.shape == (B, N_GMM)
    # bf16 MXU weights -> compare against the f32 reference with loosened tolerances.
    assert jnp.allclose(enc, enc_r, atol=3e-2, rtol=3e-2)
    assert jnp.allclose(dec, dec_r, atol=3e-2, rtol=3e-2)
    assert jnp.allclose(z, z_r, atol=3e-2, rtol=3e-2)
    assert jnp.allclose(gamma, gamma_r, atol=3e-2, rtol=3e-2)
    # approx reciprocal in the softmax -> row sums are ~1 to EUP-approx precision.
    assert jnp.allclose(jnp.sum(gamma, axis=1), 1.0, atol=1e-2)

    print("KERNEL_OK")
</pallas_src>

<mosaic_0001>
module attributes {stable_mosaic.version = 11 : i64} {
  func.func @kernel(%arg0: i32, %arg1: memref<8x32xf32, #tpu.memory_space<vmem>>, %arg2: memref<32x512xbf16, #tpu.memory_space<vmem>>, %arg3: memref<512x256xbf16, #tpu.memory_space<vmem>>, %arg4: memref<256x128xbf16, #tpu.memory_space<vmem>>, %arg5: memref<128x2xbf16, #tpu.memory_space<vmem>>, %arg6: memref<2x138xbf16, #tpu.memory_space<vmem>>, %arg7: memref<128x256xbf16, #tpu.memory_space<vmem>>, %arg8: memref<256x512xbf16, #tpu.memory_space<vmem>>, %arg9: memref<512x32xbf16, #tpu.memory_space<vmem>>, %arg10: memref<10x5xbf16, #tpu.memory_space<vmem>>, %arg11: memref<9x512xf32, #tpu.memory_space<vmem>>, %arg12: memref<8x128xf32, #tpu.memory_space<vmem>>) attributes {dimension_semantics = [#tpu.dimension_semantics<parallel>], iteration_bounds = array<i64: 1>, scalar_prefetch = 0 : i64, scratch_operands = 0 : i64, tpu.core_type = #tpu.core_type<tc>, window_params = [{transform_indices = @transform_0, window_bounds = array<i64: 8, 32>}, {pipeline_mode = #tpu.pipeline_mode<synchronous>, transform_indices = @transform_1, window_bounds = array<i64: 32, 512>}, {pipeline_mode = #tpu.pipeline_mode<synchronous>, transform_indices = @transform_2, window_bounds = array<i64: 512, 256>}, {pipeline_mode = #tpu.pipeline_mode<synchronous>, transform_indices = @transform_3, window_bounds = array<i64: 256, 128>}, {pipeline_mode = #tpu.pipeline_mode<synchronous>, transform_indices = @transform_4, window_bounds = array<i64: 128, 2>}, {pipeline_mode = #tpu.pipeline_mode<synchronous>, transform_indices = @transform_5, window_bounds = array<i64: 2, 138>}, {pipeline_mode = #tpu.pipeline_mode<synchronous>, transform_indices = @transform_6, window_bounds = array<i64: 128, 256>}, {pipeline_mode = #tpu.pipeline_mode<synchronous>, transform_indices = @transform_7, window_bounds = array<i64: 256, 512>}, {pipeline_mode = #tpu.pipeline_mode<synchronous>, transform_indices = @transform_8, window_bounds = array<i64: 512, 32>}, {pipeline_mode = #tpu.pipeline_mode<synchronous>, transform_indices = @transform_9, window_bounds = array<i64: 10, 5>}, {pipeline_mode = #tpu.pipeline_mode<synchronous>, transform_indices = @transform_10, window_bounds = array<i64: 9, 512>}, {transform_indices = @transform_11, window_bounds = array<i64: 8, 128>}]} {
    %c0 = arith.constant 0 : index
    %c0_0 = arith.constant 0 : index
    %0 = vector.load %arg1[%c0, %c0_0] : memref<8x32xf32, #tpu.memory_space<vmem>>, vector<8x32xf32>
    %c0_1 = arith.constant 0 : index
    %c0_2 = arith.constant 0 : index
    %1 = vector.load %arg11[%c0_1, %c0_2] : memref<9x512xf32, #tpu.memory_space<vmem>>, vector<1x512xf32>
    %2 = arith.truncf %0 : vector<8x32xf32> to vector<8x32xbf16>
    %c0_3 = arith.constant 0 : index
    %c0_4 = arith.constant 0 : index
    %3 = vector.load %arg2[%c0_3, %c0_4] : memref<32x512xbf16, #tpu.memory_space<vmem>>, vector<32x512xbf16>
    %cst = arith.constant dense<0.000000e+00> : vector<8x512xf32>
    %4 = tpu.matmul %2, %3, %cst {dimension_numbers = #tpu.dot_dimension_numbers<[1], [0], [0], [1], [0, 0, 1, 1], [], []>} : vector<8x32xbf16>, vector<32x512xbf16>, vector<8x512xf32> -> vector<8x512xf32>
    %5 = vector.broadcast %1 : vector<1x512xf32> to vector<8x512xf32>
    %6 = arith.addf %4, %5 : vector<8x512xf32>
    %7 = math.tanh %6 : vector<8x512xf32>
    %c1 = arith.constant 1 : index
    %c0_5 = arith.constant 0 : index
    %8 = vector.load %arg11[%c1, %c0_5] : memref<9x512xf32, #tpu.memory_space<vmem>>, vector<1x256xf32>
    %9 = arith.truncf %7 : vector<8x512xf32> to vector<8x512xbf16>
    %c0_6 = arith.constant 0 : index
    %c0_7 = arith.constant 0 : index
    %10 = vector.load %arg3[%c0_6, %c0_7] : memref<512x256xbf16, #tpu.memory_space<vmem>>, vector<512x256xbf16>
    %cst_8 = arith.constant dense<0.000000e+00> : vector<8x256xf32>
    %11 = tpu.matmul %9, %10, %cst_8 {dimension_numbers = #tpu.dot_dimension_numbers<[1], [0], [0], [1], [0, 0, 1, 1], [], []>} : vector<8x512xbf16>, vector<512x256xbf16>, vector<8x256xf32> -> vector<8x256xf32>
    %12 = vector.broadcast %8 : vector<1x256xf32> to vector<8x256xf32>
    %13 = arith.addf %11, %12 : vector<8x256xf32>
    %14 = math.tanh %13 : vector<8x256xf32>
    %c2 = arith.constant 2 : index
    %c0_9 = arith.constant 0 : index
    %15 = vector.load %arg11[%c2, %c0_9] : memref<9x512xf32, #tpu.memory_space<vmem>>, vector<1x128xf32>
    %16 = arith.truncf %14 : vector<8x256xf32> to vector<8x256xbf16>
    %c0_10 = arith.constant 0 : index
    %c0_11 = arith.constant 0 : index
    %17 = vector.load %arg4[%c0_10, %c0_11] : memref<256x128xbf16, #tpu.memory_space<vmem>>, vector<256x128xbf16>
    %cst_12 = arith.constant dense<0.000000e+00> : vector<8x128xf32>
    %18 = tpu.matmul %16, %17, %cst_12 {dimension_numbers = #tpu.dot_dimension_numbers<[1], [0], [0], [1], [0, 0, 1, 1], [], []>} : vector<8x256xbf16>, vector<256x128xbf16>, vector<8x128xf32> -> vector<8x128xf32>
    %19 = vector.broadcast %15 : vector<1x128xf32> to vector<8x128xf32>
    %20 = arith.addf %18, %19 : vector<8x128xf32>
    %21 = math.tanh %20 : vector<8x128xf32>
    %c3 = arith.constant 3 : index
    %c0_13 = arith.constant 0 : index
    %22 = vector.load %arg11[%c3, %c0_13] : memref<9x512xf32, #tpu.memory_space<vmem>>, vector<1x2xf32>
    %23 = arith.truncf %21 : vector<8x128xf32> to vector<8x128xbf16>
    %c0_14 = arith.constant 0 : index
    %c0_15 = arith.constant 0 : index
    %24 = vector.load %arg5[%c0_14, %c0_15] : memref<128x2xbf16, #tpu.memory_space<vmem>>, vector<128x2xbf16>
    %cst_16 = arith.constant dense<0.000000e+00> : vector<8x2xf32>
    %25 = tpu.matmul %23, %24, %cst_16 {dimension_numbers = #tpu.dot_dimension_numbers<[1], [0], [0], [1], [0, 0, 1, 1], [], []>} : vector<8x128xbf16>, vector<128x2xbf16>, vector<8x2xf32> -> vector<8x2xf32>
    %26 = vector.broadcast %22 : vector<1x2xf32> to vector<8x2xf32>
    %27 = arith.addf %25, %26 : vector<8x2xf32>
    %c4 = arith.constant 4 : index
    %c0_17 = arith.constant 0 : index
    %28 = vector.load %arg11[%c4, %c0_17] : memref<9x512xf32, #tpu.memory_space<vmem>>, vector<1x138xf32>
    %29 = arith.truncf %27 : vector<8x2xf32> to vector<8x2xbf16>
    %c0_18 = arith.constant 0 : index
    %c0_19 = arith.constant 0 : index
    %30 = vector.load %arg6[%c0_18, %c0_19] : memref<2x138xbf16, #tpu.memory_space<vmem>>, vector<2x138xbf16>
    %cst_20 = arith.constant dense<0.000000e+00> : vector<8x138xf32>
    %31 = tpu.matmul %29, %30, %cst_20 {dimension_numbers = #tpu.dot_dimension_numbers<[1], [0], [0], [1], [0, 0, 1, 1], [], []>} : vector<8x2xbf16>, vector<2x138xbf16>, vector<8x138xf32> -> vector<8x138xf32>
    %32 = vector.broadcast %28 : vector<1x138xf32> to vector<8x138xf32>
    %33 = arith.addf %31, %32 : vector<8x138xf32>
    %34 = math.tanh %33 : vector<8x138xf32>
    %35 = vector.extract_strided_slice %34 {offsets = [0, 0], sizes = [8, 128], strides = [1, 1]} : vector<8x138xf32> to vector<8x128xf32>
    %36 = vector.extract_strided_slice %34 {offsets = [0, 128], sizes = [8, 10], strides = [1, 1]} : vector<8x138xf32> to vector<8x10xf32>
    %c5 = arith.constant 5 : index
    %c0_21 = arith.constant 0 : index
    %37 = vector.load %arg11[%c5, %c0_21] : memref<9x512xf32, #tpu.memory_space<vmem>>, vector<1x256xf32>
    %38 = arith.truncf %35 : vector<8x128xf32> to vector<8x128xbf16>
    %c0_22 = arith.constant 0 : index
    %c0_23 = arith.constant 0 : index
    %39 = vector.load %arg7[%c0_22, %c0_23] : memref<128x256xbf16, #tpu.memory_space<vmem>>, vector<128x256xbf16>
    %cst_24 = arith.constant dense<0.000000e+00> : vector<8x256xf32>
    %40 = tpu.matmul %38, %39, %cst_24 {dimension_numbers = #tpu.dot_dimension_numbers<[1], [0], [0], [1], [0, 0, 1, 1], [], []>} : vector<8x128xbf16>, vector<128x256xbf16>, vector<8x256xf32> -> vector<8x256xf32>
    %41 = vector.broadcast %37 : vector<1x256xf32> to vector<8x256xf32>
    %42 = arith.addf %40, %41 : vector<8x256xf32>
    %43 = math.tanh %42 : vector<8x256xf32>
    %c6 = arith.constant 6 : index
    %c0_25 = arith.constant 0 : index
    %44 = vector.load %arg11[%c6, %c0_25] : memref<9x512xf32, #tpu.memory_space<vmem>>, vector<1x512xf32>
    %45 = arith.truncf %43 : vector<8x256xf32> to vector<8x256xbf16>
    %c0_26 = arith.constant 0 : index
    %c0_27 = arith.constant 0 : index
    %46 = vector.load %arg8[%c0_26, %c0_27] : memref<256x512xbf16, #tpu.memory_space<vmem>>, vector<256x512xbf16>
    %cst_28 = arith.constant dense<0.000000e+00> : vector<8x512xf32>
    %47 = tpu.matmul %45, %46, %cst_28 {dimension_numbers = #tpu.dot_dimension_numbers<[1], [0], [0], [1], [0, 0, 1, 1], [], []>} : vector<8x256xbf16>, vector<256x512xbf16>, vector<8x512xf32> -> vector<8x512xf32>
    %48 = vector.broadcast %44 : vector<1x512xf32> to vector<8x512xf32>
    %49 = arith.addf %47, %48 : vector<8x512xf32>
    %50 = math.tanh %49 : vector<8x512xf32>
    %c7 = arith.constant 7 : index
    %c0_29 = arith.constant 0 : index
    %51 = vector.load %arg11[%c7, %c0_29] : memref<9x512xf32, #tpu.memory_space<vmem>>, vector<1x32xf32>
    %52 = arith.truncf %50 : vector<8x512xf32> to vector<8x512xbf16>
    %c0_30 = arith.constant 0 : index
    %c0_31 = arith.constant 0 : index
    %53 = vector.load %arg9[%c0_30, %c0_31] : memref<512x32xbf16, #tpu.memory_space<vmem>>, vector<512x32xbf16>
    %cst_32 = arith.constant dense<0.000000e+00> : vector<8x32xf32>
    %54 = tpu.matmul %52, %53, %cst_32 {dimension_numbers = #tpu.dot_dimension_numbers<[1], [0], [0], [1], [0, 0, 1, 1], [], []>} : vector<8x512xbf16>, vector<512x32xbf16>, vector<8x32xf32> -> vector<8x32xf32>
    %55 = vector.broadcast %51 : vector<1x32xf32> to vector<8x32xf32>
    %56 = arith.addf %54, %55 : vector<8x32xf32>
    %c8 = arith.constant 8 : index
    %c0_33 = arith.constant 0 : index
    %57 = vector.load %arg11[%c8, %c0_33] : memref<9x512xf32, #tpu.memory_space<vmem>>, vector<1x5xf32>
    %58 = arith.truncf %36 : vector<8x10xf32> to vector<8x10xbf16>
    %c0_34 = arith.constant 0 : index
    %c0_35 = arith.constant 0 : index
    %59 = vector.load %arg10[%c0_34, %c0_35] : memref<10x5xbf16, #tpu.memory_space<vmem>>, vector<10x5xbf16>
    %cst_36 = arith.constant dense<0.000000e+00> : vector<8x5xf32>
    %60 = tpu.matmul %58, %59, %cst_36 {dimension_numbers = #tpu.dot_dimension_numbers<[1], [0], [0], [1], [0, 0, 1, 1], [], []>} : vector<8x10xbf16>, vector<10x5xbf16>, vector<8x5xf32> -> vector<8x5xf32>
    %61 = vector.broadcast %57 : vector<1x5xf32> to vector<8x5xf32>
    %62 = arith.addf %60, %61 : vector<8x5xf32>
    %cst_37 = arith.constant dense<0xFF800000> : vector<8xf32>
    %63 = vector.multi_reduction <maximumf>, %62, %cst_37 [1] : vector<8x5xf32> to vector<8xf32>
    %64 = vector.shape_cast %63 : vector<8xf32> to vector<8x1xf32>
    %65 = vector.broadcast %64 : vector<8x1xf32> to vector<8x5xf32>
    %66 = arith.subf %62, %65 : vector<8x5xf32>
    %67 = math.exp %66 : vector<8x5xf32>
    %cst_38 = arith.constant dense<0.000000e+00> : vector<8xf32>
    %68 = vector.multi_reduction <add>, %67, %cst_38 [1] : vector<8x5xf32> to vector<8xf32>
    %69 = vector.shape_cast %68 : vector<8xf32> to vector<8x1xf32>
    %70 = tpu.reciprocal %69 {approx = true} : vector<8x1xf32> -> vector<8x1xf32>
    %71 = vector.broadcast %70 : vector<8x1xf32> to vector<8x5xf32>
    %72 = arith.mulf %67, %71 : vector<8x5xf32>
    %cst_39 = arith.constant 0.000000e+00 : f32
    %73 = vector.broadcast %cst_39 : f32 to vector<8x89xf32>
    %74 = tpu.concatenate %27, %72, %56, %73 in 1 : vector<8x2xf32>, vector<8x5xf32>, vector<8x32xf32>, vector<8x89xf32> -> vector<8x128xf32>
    %c0_40 = arith.constant 0 : index
    %c0_41 = arith.constant 0 : index
    %75 = vector.load %arg12[%c0_40, %c0_41] : memref<8x128xf32, #tpu.memory_space<vmem>>, vector<8x128xf32>
    tpu.vector_store %arg12[%c0_40, %c0_41], %74 {strides = array<i32>} : memref<8x128xf32, #tpu.memory_space<vmem>>, vector<8x128xf32>,
    return
  }
  func.func @transform_0(%arg0: i32) -> (i32, i32) {
    %c0_i32 = arith.constant 0 : i32
    %c0_i32_0 = arith.constant 0 : i32
    return %arg0, %c0_i32 : i32, i32
  }
  func.func @transform_1(%arg0: i32) -> (i32, i32) {
    %c0_i32 = arith.constant 0 : i32
    %c0_i32_0 = arith.constant 0 : i32
    %c0_i32_1 = arith.constant 0 : i32
    return %c0_i32, %c0_i32_0 : i32, i32
  }
  func.func @transform_2(%arg0: i32) -> (i32, i32) {
    %c0_i32 = arith.constant 0 : i32
    %c0_i32_0 = arith.constant 0 : i32
    %c0_i32_1 = arith.constant 0 : i32
    return %c0_i32, %c0_i32_0 : i32, i32
  }
  func.func @transform_3(%arg0: i32) -> (i32, i32) {
    %c0_i32 = arith.constant 0 : i32
    %c0_i32_0 = arith.constant 0 : i32
    %c0_i32_1 = arith.constant 0 : i32
    return %c0_i32, %c0_i32_0 : i32, i32
  }
  func.func @transform_4(%arg0: i32) -> (i32, i32) {
    %c0_i32 = arith.constant 0 : i32
    %c0_i32_0 = arith.constant 0 : i32
    %c0_i32_1 = arith.constant 0 : i32
    return %c0_i32, %c0_i32_0 : i32, i32
  }
  func.func @transform_5(%arg0: i32) -> (i32, i32) {
    %c0_i32 = arith.constant 0 : i32
    %c0_i32_0 = arith.constant 0 : i32
    %c0_i32_1 = arith.constant 0 : i32
    return %c0_i32, %c0_i32_0 : i32, i32
  }
  func.func @transform_6(%arg0: i32) -> (i32, i32) {
    %c0_i32 = arith.constant 0 : i32
    %c0_i32_0 = arith.constant 0 : i32
    %c0_i32_1 = arith.constant 0 : i32
    return %c0_i32, %c0_i32_0 : i32, i32
  }
  func.func @transform_7(%arg0: i32) -> (i32, i32) {
    %c0_i32 = arith.constant 0 : i32
    %c0_i32_0 = arith.constant 0 : i32
    %c0_i32_1 = arith.constant 0 : i32
    return %c0_i32, %c0_i32_0 : i32, i32
  }
  func.func @transform_8(%arg0: i32) -> (i32, i32) {
    %c0_i32 = arith.constant 0 : i32
    %c0_i32_0 = arith.constant 0 : i32
    %c0_i32_1 = arith.constant 0 : i32
    return %c0_i32, %c0_i32_0 : i32, i32
  }
  func.func @transform_9(%arg0: i32) -> (i32, i32) {
    %c0_i32 = arith.constant 0 : i32
    %c0_i32_0 = arith.constant 0 : i32
    %c0_i32_1 = arith.constant 0 : i32
    return %c0_i32, %c0_i32_0 : i32, i32
  }
  func.func @transform_10(%arg0: i32) -> (i32, i32) {
    %c0_i32 = arith.constant 0 : i32
    %c0_i32_0 = arith.constant 0 : i32
    %c0_i32_1 = arith.constant 0 : i32
    return %c0_i32, %c0_i32_0 : i32, i32
  }
  func.func @transform_11(%arg0: i32) -> (i32, i32) {
    %c0_i32 = arith.constant 0 : i32
    %c0_i32_0 = arith.constant 0 : i32
    return %arg0, %c0_i32 : i32, i32
  }
}

</mosaic_0001>

<llo_original>
// kernel: autoencoder_gmm_forward.1
$region0: #{autoencoder_gmm_forward.1}
  #allocation0 [shape = 'u32[]', space=smem, size = 0x4, offset = 0x4, fixed_abs, tag = 'smem constant byte address 0x4 - core index']
  #allocation1 [shape = 'u32[72,128]{1,0:T(1,128)}', space=vmem, size = 0x9000, scoped, tag = 'internal scratch']
  %s0 = inlined_call_operand.vmem [shape: f32[8,32], index: 0, kind: input, shape index: {}]
  %s1 = inlined_call_operand.vmem [shape: bf16[32,512], index: 1, kind: input, shape index: {}]
  %s2 = inlined_call_operand.hbm [shape: bf16[512,256], index: 2, kind: input, shape index: {}]
  %s3 = inlined_call_operand.vmem [shape: bf16[256,128], index: 3, kind: input, shape index: {}]
  %s4 = inlined_call_operand.vmem [shape: bf16[128,2], index: 4, kind: input, shape index: {}]
  %s5 = inlined_call_operand.vmem [shape: bf16[2,138], index: 5, kind: input, shape index: {}]
  %s6 = inlined_call_operand.vmem [shape: bf16[128,256], index: 6, kind: input, shape index: {}]
  %s7 = inlined_call_operand.hbm [shape: bf16[256,512], index: 7, kind: input, shape index: {}]
  %s8 = inlined_call_operand.vmem [shape: bf16[512,32], index: 8, kind: input, shape index: {}]
  %s9 = inlined_call_operand.vmem [shape: bf16[10,5], index: 9, kind: input, shape index: {}]
  %s10 = inlined_call_operand.vmem [shape: f32[9,512], index: 10, kind: input, shape index: {}]
  %s11 = inlined_call_operand.vmem [shape: f32[8,128], index: 11, kind: output, shape index: {}]
  %s12 = sld [smem:[#allocation0]]
  $region62: #{autoencoder_gmm_forward.1} parent=0
    _
  %s14 = ssub.s32 1, %s12
  %s15 = scalar_select 0, %s14, %s12
  $region1: #{autoencoder_gmm_forward.1} parent=0
    #allocation2 [shape = 'u8[262144]{0}', space=vmem, size = 0x40000, scoped, tag = 'input window, operand 2, single buffered']
    #allocation3 [shape = 's32[1]{0}', space=sflag, size = 0x4, scoped, tag = 'scoped memory for autoencoder_gmm_forward.1']
    #allocation4 [shape = 'u8[262144]{0}', space=vmem, size = 0x40000, scoped, tag = 'input window, operand 7, single buffered']
    #allocation5 [shape = 's32[1]{0}', space=sflag, size = 0x4, scoped, tag = 'scoped memory for autoencoder_gmm_forward.1']
    %16 = vsyncpa [#allocation3], 0
    %17 = vsyncpa [#allocation5], 0
    // Predicated region
    $region2: #{autoencoder_gmm_forward.1} parent=1 // pred_check
      _
    $region3: #{autoencoder_gmm_forward.1} parent=1 // pred_check_branch
      %19 = sbr.rel (0) target = $region5
    $region4: #{autoencoder_gmm_forward.1} parent=1 // pred_region
      _
    $region5: #{autoencoder_gmm_forward.1} parent=1 // pred_fallthru
      _
    // Predicated region
    $region6: #{autoencoder_gmm_forward.1} parent=1 // pred_check
      _
    $region7: #{autoencoder_gmm_forward.1} parent=1 // pred_check_branch
      %21 = sbr.rel (0) target = $region9
    $region8: #{autoencoder_gmm_forward.1} parent=1 // pred_region
      _
    $region9: #{autoencoder_gmm_forward.1} parent=1 // pred_fallthru
      _
    // Predicated region
    $region10: #{autoencoder_gmm_forward.1} parent=1 // pred_check
      _
    $region11: #{autoencoder_gmm_forward.1} parent=1 // pred_check_branch
      %23 = sbr.rel (0) target = $region13
    $region12: #{autoencoder_gmm_forward.1} parent=1 // pred_region
      %25 = vsyncadd [#allocation3], 0
      %s26 = sshll.u32 %s2, 4
      %s27 = int_to_ptr.hbm [resolvable:$true] %s26
      %s28 = sshll.u32 [#allocation2], 4
      %s29 = int_to_ptr.vmem [resolvable:$true] %s28
      %34 = dma.hbm_to_vmem [thread:$0]  %s27, 8192, %s29, [#allocation3], 128, 128, 8
    $region13: #{autoencoder_gmm_forward.1} parent=1 // pred_fallthru
      _
    // Predicated region
    $region14: #{autoencoder_gmm_forward.1} parent=1 // pred_check
      _
    $region15: #{autoencoder_gmm_forward.1} parent=1 // pred_check_branch
      %36 = sbr.rel (0) target = $region17
    $region16: #{autoencoder_gmm_forward.1} parent=1 // pred_region
      _
    $region17: #{autoencoder_gmm_forward.1} parent=1 // pred_fallthru
      _
    // Predicated region
    $region18: #{autoencoder_gmm_forward.1} parent=1 // pred_check
      _
    $region19: #{autoencoder_gmm_forward.1} parent=1 // pred_check_branch
      %38 = sbr.rel (0) target = $region21
    $region20: #{autoencoder_gmm_forward.1} parent=1 // pred_region
      _
    $region21: #{autoencoder_gmm_forward.1} parent=1 // pred_fallthru
      _
    // Predicated region
    $region22: #{autoencoder_gmm_forward.1} parent=1 // pred_check
      _
    $region23: #{autoencoder_gmm_forward.1} parent=1 // pred_check_branch
      %40 = sbr.rel (0) target = $region25
    $region24: #{autoencoder_gmm_forward.1} parent=1 // pred_region
      _
    $region25: #{autoencoder_gmm_forward.1} parent=1 // pred_fallthru
      _
    // Predicated region
    $region26: #{autoencoder_gmm_forward.1} parent=1 // pred_check
      _
    $region27: #{autoencoder_gmm_forward.1} parent=1 // pred_check_branch
      %42 = sbr.rel (0) target = $region29
    $region28: #{autoencoder_gmm_forward.1} parent=1 // pred_region
      _
    $region29: #{autoencoder_gmm_forward.1} parent=1 // pred_fallthru
      _
    // Predicated region
    $region30: #{autoencoder_gmm_forward.1} parent=1 // pred_check
      _
    $region31: #{autoencoder_gmm_forward.1} parent=1 // pred_check_branch
      %44 = sbr.rel (0) target = $region33
    $region32: #{autoencoder_gmm_forward.1} parent=1 // pred_region
      %46 = vsyncadd [#allocation5], 0
      %s47 = sshll.u32 %s7, 4
      %s48 = int_to_ptr.hbm [resolvable:$true] %s47
      %s49 = sshll.u32 [#allocation4], 4
      %s50 = int_to_ptr.vmem [resolvable:$true] %s49
      %55 = dma.hbm_to_vmem [thread:$0]  %s48, 8192, %s50, [#allocation5], 256, 256, 16
    $region33: #{autoencoder_gmm_forward.1} parent=1 // pred_fallthru
      _
    // Predicated region
    $region34: #{autoencoder_gmm_forward.1} parent=1 // pred_check
      _
    $region35: #{autoencoder_gmm_forward.1} parent=1 // pred_check_branch
      %57 = sbr.rel (0) target = $region37
    $region36: #{autoencoder_gmm_forward.1} parent=1 // pred_region
      _
    $region37: #{autoencoder_gmm_forward.1} parent=1 // pred_fallthru
      _
    // Predicated region
    $region38: #{autoencoder_gmm_forward.1} parent=1 // pred_check
      _
    $region39: #{autoencoder_gmm_forward.1} parent=1 // pred_check_branch
      %59 = sbr.rel (0) target = $region41
    $region40: #{autoencoder_gmm_forward.1} parent=1 // pred_region
      _
    $region41: #{autoencoder_gmm_forward.1} parent=1 // pred_fallthru
      _
    // Predicated region
    $region42: #{autoencoder_gmm_forward.1} parent=1 // pred_check
      _
    $region43: #{autoencoder_gmm_forward.1} parent=1 // pred_check_branch
      %61 = sbr.rel (0) target = $region45
    $region44: #{autoencoder_gmm_forward.1} parent=1 // pred_region
      _
    $region45: #{autoencoder_gmm_forward.1} parent=1 // pred_fallthru
      _
    // Predicated region
    $region46: #{autoencoder_gmm_forward.1} parent=1 // pred_check
      _
    $region47: #{autoencoder_gmm_forward.1} parent=1 // pred_check_branch
      %63 = sbr.rel (0) target = $region49
    $region48: #{autoencoder_gmm_forward.1} parent=1 // pred_region
      %65 = dma.done [#allocation3], 8192
    $region49: #{autoencoder_gmm_forward.1} parent=1 // pred_fallthru
      _
    // Predicated region
    $region50: #{autoencoder_gmm_forward.1} parent=1 // pred_check
      _
    $region51: #{autoencoder_gmm_forward.1} parent=1 // pred_check_branch
      %67 = sbr.rel (0) target = $region53
    $region52: #{autoencoder_gmm_forward.1} parent=1 // pred_region
      %69 = dma.done [#allocation5], 8192
    $region53: #{autoencoder_gmm_forward.1} parent=1 // pred_fallthru
      _
    %v71 = vld [vmem:[%s0] sm:$0xff]
    %v72 = vld [vmem:[%s10] ss:$8 sm:$0xf]
    %v73 = vpack.c.bf16 %v71, %v71
    %v74 = vld [vmem:[%s1] sm:$0xff]
    %v75 = vld [vmem:[%s1 + $0x8] sm:$0xff]
    %v76 = vld [vmem:[%s1 + $0x10] sm:$0xff]
    %v77 = vld [vmem:[%s1 + $0x18] sm:$0xff]
    %v78 = vld [vmem:[%s1 + $0x20] sm:$0xff]
    %v79 = vld [vmem:[%s1 + $0x28] sm:$0xff]
    %v80 = vld [vmem:[%s1 + $0x30] sm:$0xff]
    %v81 = vld [vmem:[%s1 + $0x38] sm:$0xff]
    %v83 = vperm.slane %v72, 0
    %v84 = vperm.slane %v72, 1
    %v85 = vperm.slane %v72, 2
    %v86 = vperm.slane %v72, 3
    %v99 = vunpack.c.l.b16 %v74
    %v100 = vunpack.c.h.b16 %v74
    %v101 = vunpack.c.l.b16 %v75
    %v102 = vunpack.c.h.b16 %v75
    %v103 = vunpack.c.l.b16 %v76
    %v104 = vunpack.c.h.b16 %v76
    %v105 = vunpack.c.l.b16 %v77
    %v106 = vunpack.c.h.b16 %v77
    %v107 = vunpack.c.l.b16 %v78
    %v108 = vunpack.c.h.b16 %v78
    %v109 = vunpack.c.l.b16 %v79
    %v110 = vunpack.c.h.b16 %v79
    %v111 = vunpack.c.l.b16 %v80
    %v112 = vunpack.c.h.b16 %v80
    %v113 = vunpack.c.l.b16 %v81
    %v114 = vunpack.c.h.b16 %v81
    %v115 = vpack.c.b16 %v103, %v99
    %v116 = vpack.c.b16 %v104, %v100
    %v117 = vpack.c.b16 %v105, %v101
    %v118 = vpack.c.b16 %v106, %v102
    %v119 = vpack.c.b16 %v111, %v107
    %v120 = vpack.c.b16 %v112, %v108
    %v121 = vpack.c.b16 %v113, %v109
    %v122 = vpack.c.b16 %v114, %v110
    %vm131 = vcmask 261120
    %v133 = vsel %vm131, %v73, 0
    %135 = vmatpush.bf16.msra.mxu0 0
    %136 = vmatpush.bf16.msra.mxu0 0
    %137 = vmatpush.bf16.msra.mxu0 0
    %138 = vmatpush.bf16.msra.mxu0 0
    %139 = vmatpush.bf16.msra.mxu0 0
    %140 = vmatpush.bf16.msra.mxu0 0
    %141 = vmatpush.bf16.msra.mxu0 %v119
    %142 = vmatpush.bf16.msra.mxu0 %v115
    %143 = vmatmul.bf16.gmra.mxu0 %v133
    %v144 = vpop.f32.mrf.mxu0
    %v145 = vadd.f32 %v83, %v144
    %v146 = vpop.f32.mrf.mxu0
    %147 = vdwg.mxu0
    %148 = vmatpush.bf16.msra.mxu0 0
    %149 = vmatpush.bf16.msra.mxu0 0
    %150 = vmatpush.bf16.msra.mxu0 0
    %151 = vmatpush.bf16.msra.mxu0 0
    %152 = vmatpush.bf16.msra.mxu0 0
    %153 = vmatpush.bf16.msra.mxu0 0
    %154 = vmatpush.bf16.msra.mxu0 %v120
    %155 = vmatpush.bf16.msra.mxu0 %v116
    %156 = vmatmul.bf16.gmra.mxu0 %v133
    %v157 = vpop.f32.mrf.mxu0
    %v158 = vadd.f32 %v84, %v157
    %v159 = vpop.f32.mrf.mxu0
    %160 = vdwg.mxu0
    %161 = vmatpush.bf16.msra.mxu0 0
    %162 = vmatpush.bf16.msra.mxu0 0
    %163 = vmatpush.bf16.msra.mxu0 0
    %164 = vmatpush.bf16.msra.mxu0 0
    %165 = vmatpush.bf16.msra.mxu0 0
    %166 = vmatpush.bf16.msra.mxu0 0
    %167 = vmatpush.bf16.msra.mxu0 %v121
    %168 = vmatpush.bf16.msra.mxu0 %v117
    %169 = vmatmul.bf16.gmra.mxu0 %v133
    %v170 = vpop.f32.mrf.mxu0
    %v171 = vadd.f32 %v85, %v170
    %v172 = vpop.f32.mrf.mxu0
    %173 = vdwg.mxu0
    %174 = vmatpush.bf16.msra.mxu0 0
    %175 = vmatpush.bf16.msra.mxu0 0
    %176 = vmatpush.bf16.msra.mxu0 0
    %177 = vmatpush.bf16.msra.mxu0 0
    %178 = vmatpush.bf16.msra.mxu0 0
    %179 = vmatpush.bf16.msra.mxu0 0
    %180 = vmatpush.bf16.msra.mxu0 %v122
    %181 = vmatpush.bf16.msra.mxu0 %v118
    %182 = vmatmul.bf16.gmra.mxu0 %v133
    %v183 = vpop.f32.mrf.mxu0
    %v184 = vadd.f32 %v86, %v183
    %v185 = vpop.f32.mrf.mxu0
    %186 = vdwg.mxu0
    %v187 = vtanh.pop %v145
    %v188 = vtanh.pop %v158
    %v189 = vtanh.pop %v171
    %v190 = vtanh.pop %v184
    %s191 = scalar_lea.vmem %s10, 1
    %v192 = vld [vmem:[%s191] ss:$8 sm:$0x3]
    %v193 = vpack.c.bf16 %v187, %v187
    %v194 = vpack.c.bf16 %v188, %v188
    %v195 = vpack.c.bf16 %v189, %v189
    %v196 = vpack.c.bf16 %v190, %v190
    %v197 = vld [vmem:[#allocation2] sm:$0xff]
    %v198 = vld [vmem:[#allocation2 + $0x8] sm:$0xff]
    %v199 = vld [vmem:[#allocation2 + $0x10] sm:$0xff]
    %v200 = vld [vmem:[#allocation2 + $0x18] sm:$0xff]
    %v201 = vld [vmem:[#allocation2 + $0x20] sm:$0xff]
    %v202 = vld [vmem:[#allocation2 + $0x28] sm:$0xff]
    %v203 = vld [vmem:[#allocation2 + $0x30] sm:$0xff]
    %v204 = vld [vmem:[#allocation2 + $0x38] sm:$0xff]
    %v205 = vld [vmem:[#allocation2 + $0x40] sm:$0xff]
    %v206 = vld [vmem:[#allocation2 + $0x48] sm:$0xff]
    %v207 = vld [vmem:[#allocation2 + $0x50] sm:$0xff]
    %v208 = vld [vmem:[#allocation2 + $0x58] sm:$0xff]
    %v209 = vld [vmem:[#allocation2 + $0x60] sm:$0xff]
    %v210 = vld [vmem:[#allocation2 + $0x68] sm:$0xff]
    %v211 = vld [vmem:[#allocation2 + $0x70] sm:$0xff]
    %v212 = vld [vmem:[#allocation2 + $0x78] sm:$0xff]
    %v213 = vld [vmem:[#allocation2 + $0x80] sm:$0xff]
    %v214 = vld [vmem:[#allocation2 + $0x88] sm:$0xff]
    %v215 = vld [vmem:[#allocation2 + $0x90] sm:$0xff]
    %v216 = vld [vmem:[#allocation2 + $0x98] sm:$0xff]
    %v217 = vld [vmem:[#allocation2 + $0xa0] sm:$0xff]
    %v218 = vld [vmem:[#allocation2 + $0xa8] sm:$0xff]
    %v219 = vld [vmem:[#allocation2 + $0xb0] sm:$0xff]
    %v220 = vld [vmem:[#allocation2 + $0xb8] sm:$0xff]
    %v221 = vld [vmem:[#allocation2 + $0xc0] sm:$0xff]
    %v222 = vld [vmem:[#allocation2 + $0xc8] sm:$0xff]
    %v223 = vld [vmem:[#allocation2 + $0xd0] sm:$0xff]
    %v224 = vld [vmem:[#allocation2 + $0xd8] sm:$0xff]
    %v225 = vld [vmem:[#allocation2 + $0xe0] sm:$0xff]
    %v226 = vld [vmem:[#allocation2 + $0xe8] sm:$0xff]
    %v227 = vld [vmem:[#allocation2 + $0xf0] sm:$0xff]
    %v228 = vld [vmem:[#allocation2 + $0xf8] sm:$0xff]
    %v229 = vld [vmem:[#allocation2 + $0x100] sm:$0xff]
    %v230 = vld [vmem:[#allocation2 + $0x108] sm:$0xff]
    %v231 = vld [vmem:[#allocation2 + $0x110] sm:$0xff]
    %v232 = vld [vmem:[#allocation2 + $0x118] sm:$0xff]
    %v233 = vld [vmem:[#allocation2 + $0x120] sm:$0xff]
    %v234 = vld [vmem:[#allocation2 + $0x128] sm:$0xff]
    %v235 = vld [vmem:[#allocation2 + $0x130] sm:$0xff]
    %v236 = vld [vmem:[#allocation2 + $0x138] sm:$0xff]
    %v237 = vld [vmem:[#allocation2 + $0x140] sm:$0xff]
    %v238 = vld [vmem:[#allocation2 + $0x148] sm:$0xff]
    %v239 = vld [vmem:[#allocation2 + $0x150] sm:$0xff]
    %v240 = vld [vmem:[#allocation2 + $0x158] sm:$0xff]
    %v241 = vld [vmem:[#allocation2 + $0x160] sm:$0xff]
    %v242 = vld [vmem:[#allocation2 + $0x168] sm:$0xff]
    %v243 = vld [vmem:[#allocation2 + $0x170] sm:$0xff]
    %v244 = vld [vmem:[#allocation2 + $0x178] sm:$0xff]
    %v245 = vld [vmem:[#allocation2 + $0x180] sm:$0xff]
    %v246 = vld [vmem:[#allocation2 + $0x188] sm:$0xff]
    %v247 = vld [vmem:[#allocation2 + $0x190] sm:$0xff]
    %v248 = vld [vmem:[#allocation2 + $0x198] sm:$0xff]
    %v249 = vld [vmem:[#allocation2 + $0x1a0] sm:$0xff]
    %v250 = vld [vmem:[#allocation2 + $0x1a8] sm:$0xff]
    %v251 = vld [vmem:[#allocation2 + $0x1b0] sm:$0xff]
    %v252 = vld [vmem:[#allocation2 + $0x1b8] sm:$0xff]
    %v253 = vld [vmem:[#allocation2 + $0x1c0] sm:$0xff]
    %v254 = vld [vmem:[#allocation2 + $0x1c8] sm:$0xff]
    %v255 = vld [vmem:[#allocation2 + $0x1d0] sm:$0xff]
    %v256 = vld [vmem:[#allocation2 + $0x1d8] sm:$0xff]
    %v257 = vld [vmem:[#allocation2 + $0x1e0] sm:$0xff]
    %v258 = vld [vmem:[#allocation2 + $0x1e8] sm:$0xff]
    %v259 = vld [vmem:[#allocation2 + $0x1f0] sm:$0xff]
    %v260 = vld [vmem:[#allocation2 + $0x1f8] sm:$0xff]
    %v262 = vperm.slane %v192, 0
    %v263 = vperm.slane %v192, 1
    %v330 = vunpack.c.l.b16 %v197
    %v331 = vunpack.c.h.b16 %v197
    %v332 = vunpack.c.l.b16 %v198
    %v333 = vunpack.c.h.b16 %v198
    %v334 = vunpack.c.l.b16 %v199
    %v335 = vunpack.c.h.b16 %v199
    %v336 = vunpack.c.l.b16 %v200
    %v337 = vunpack.c.h.b16 %v200
    %v338 = vunpack.c.l.b16 %v201
    %v339 = vunpack.c.h.b16 %v201
    %v340 = vunpack.c.l.b16 %v202
    %v341 = vunpack.c.h.b16 %v202
    %v342 = vunpack.c.l.b16 %v203
    %v343 = vunpack.c.h.b16 %v203
    %v344 = vunpack.c.l.b16 %v204
    %v345 = vunpack.c.h.b16 %v204
    %v346 = vunpack.c.l.b16 %v205
    %v347 = vunpack.c.h.b16 %v205
    %v348 = vunpack.c.l.b16 %v206
    %v349 = vunpack.c.h.b16 %v206
    %v350 = vunpack.c.l.b16 %v207
    %v351 = vunpack.c.h.b16 %v207
    %v352 = vunpack.c.l.b16 %v208
    %v353 = vunpack.c.h.b16 %v208
    %v354 = vunpack.c.l.b16 %v209
    %v355 = vunpack.c.h.b16 %v209
    %v356 = vunpack.c.l.b16 %v210
    %v357 = vunpack.c.h.b16 %v210
    %v358 = vunpack.c.l.b16 %v211
    %v359 = vunpack.c.h.b16 %v211
    %v360 = vunpack.c.l.b16 %v212
    %v361 = vunpack.c.h.b16 %v212
    %v362 = vunpack.c.l.b16 %v213
    %v363 = vunpack.c.h.b16 %v213
    %v364 = vunpack.c.l.b16 %v214
    %v365 = vunpack.c.h.b16 %v214
    %v366 = vunpack.c.l.b16 %v215
    %v367 = vunpack.c.h.b16 %v215
    %v368 = vunpack.c.l.b16 %v216
    %v369 = vunpack.c.h.b16 %v216
    %v370 = vunpack.c.l.b16 %v217
    %v371 = vunpack.c.h.b16 %v217
    %v372 = vunpack.c.l.b16 %v218
    %v373 = vunpack.c.h.b16 %v218
    %v374 = vunpack.c.l.b16 %v219
    %v375 = vunpack.c.h.b16 %v219
    %v376 = vunpack.c.l.b16 %v220
    %v377 = vunpack.c.h.b16 %v220
    %v378 = vunpack.c.l.b16 %v221
    %v379 = vunpack.c.h.b16 %v221
    %v380 = vunpack.c.l.b16 %v222
    %v381 = vunpack.c.h.b16 %v222
    %v382 = vunpack.c.l.b16 %v223
    %v383 = vunpack.c.h.b16 %v223
    %v384 = vunpack.c.l.b16 %v224
    %v385 = vunpack.c.h.b16 %v224
    %v386 = vunpack.c.l.b16 %v225
    %v387 = vunpack.c.h.b16 %v225
    %v388 = vunpack.c.l.b16 %v226
    %v389 = vunpack.c.h.b16 %v226
    %v390 = vunpack.c.l.b16 %v227
    %v391 = vunpack.c.h.b16 %v227
    %v392 = vunpack.c.l.b16 %v228
    %v393 = vunpack.c.h.b16 %v228
    %v394 = vunpack.c.l.b16 %v229
    %v395 = vunpack.c.h.b16 %v229
    %v396 = vunpack.c.l.b16 %v230
    %v397 = vunpack.c.h.b16 %v230
    %v398 = vunpack.c.l.b16 %v231
    %v399 = vunpack.c.h.b16 %v231
    %v400 = vunpack.c.l.b16 %v232
    %v401 = vunpack.c.h.b16 %v232
    %v402 = vunpack.c.l.b16 %v233
    %v403 = vunpack.c.h.b16 %v233
    %v404 = vunpack.c.l.b16 %v234
    %v405 = vunpack.c.h.b16 %v234
    %v406 = vunpack.c.l.b16 %v235
    %v407 = vunpack.c.h.b16 %v235
    %v408 = vunpack.c.l.b16 %v236
    %v409 = vunpack.c.h.b16 %v236
    %v410 = vunpack.c.l.b16 %v237
    %v411 = vunpack.c.h.b16 %v237
    %v412 = vunpack.c.l.b16 %v238
    %v413 = vunpack.c.h.b16 %v238
    %v414 = vunpack.c.l.b16 %v239
    %v415 = vunpack.c.h.b16 %v239
    %v416 = vunpack.c.l.b16 %v240
    %v417 = vunpack.c.h.b16 %v240
    %v418 = vunpack.c.l.b16 %v241
    %v419 = vunpack.c.h.b16 %v241
    %v420 = vunpack.c.l.b16 %v242
    %v421 = vunpack.c.h.b16 %v242
    %v422 = vunpack.c.l.b16 %v243
    %v423 = vunpack.c.h.b16 %v243
    %v424 = vunpack.c.l.b16 %v244
    %v425 = vunpack.c.h.b16 %v244
    %v426 = vunpack.c.l.b16 %v245
    %v427 = vunpack.c.h.b16 %v245
    %v428 = vunpack.c.l.b16 %v246
    %v429 = vunpack.c.h.b16 %v246
    %v430 = vunpack.c.l.b16 %v247
    %v431 = vunpack.c.h.b16 %v247
    %v432 = vunpack.c.l.b16 %v248
    %v433 = vunpack.c.h.b16 %v248
    %v434 = vunpack.c.l.b16 %v249
    %v435 = vunpack.c.h.b16 %v249
    %v436 = vunpack.c.l.b16 %v250
    %v437 = vunpack.c.h.b16 %v250
    %v438 = vunpack.c.l.b16 %v251
    %v439 = vunpack.c.h.b16 %v251
    %v440 = vunpack.c.l.b16 %v252
    %v441 = vunpack.c.h.b16 %v252
    %v442 = vunpack.c.l.b16 %v253
    %v443 = vunpack.c.h.b16 %v253
    %v444 = vunpack.c.l.b16 %v254
    %v445 = vunpack.c.h.b16 %v254
    %v446 = vunpack.c.l.b16 %v255
    %v447 = vunpack.c.h.b16 %v255
    %v448 = vunpack.c.l.b16 %v256
    %v449 = vunpack.c.h.b16 %v256
    %v450 = vunpack.c.l.b16 %v257
    %v451 = vunpack.c.h.b16 %v257
    %v452 = vunpack.c.l.b16 %v258
    %v453 = vunpack.c.h.b16 %v258
    %v454 = vunpack.c.l.b16 %v259
    %v455 = vunpack.c.h.b16 %v259
    %v456 = vunpack.c.l.b16 %v260
    %v457 = vunpack.c.h.b16 %v260
    %v458 = vpack.c.b16 %v332, %v330
    %v459 = vpack.c.b16 %v333, %v331
    %v460 = vpack.c.b16 %v336, %v334
    %v461 = vpack.c.b16 %v337, %v335
    %v462 = vpack.c.b16 %v340, %v338
    %v463 = vpack.c.b16 %v341, %v339
    %v464 = vpack.c.b16 %v344, %v342
    %v465 = vpack.c.b16 %v345, %v343
    %v466 = vpack.c.b16 %v348, %v346
    %v467 = vpack.c.b16 %v349, %v347
    %v468 = vpack.c.b16 %v352, %v350
    %v469 = vpack.c.b16 %v353, %v351
    %v470 = vpack.c.b16 %v356, %v354
    %v471 = vpack.c.b16 %v357, %v355
    %v472 = vpack.c.b16 %v360, %v358
    %v473 = vpack.c.b16 %v361, %v359
    %v474 = vpack.c.b16 %v364, %v362
    %v475 = vpack.c.b16 %v365, %v363
    %v476 = vpack.c.b16 %v368, %v366
    %v477 = vpack.c.b16 %v369, %v367
    %v478 = vpack.c.b16 %v372, %v370
    %v479 = vpack.c.b16 %v373, %v371
    %v480 = vpack.c.b16 %v376, %v374
    %v481 = vpack.c.b16 %v377, %v375
    %v482 = vpack.c.b16 %v380, %v378
    %v483 = vpack.c.b16 %v381, %v379
    %v484 = vpack.c.b16 %v384, %v382
    %v485 = vpack.c.b16 %v385, %v383
    %v486 = vpack.c.b16 %v388, %v386
    %v487 = vpack.c.b16 %v389, %v387
    %v488 = vpack.c.b16 %v392, %v390
    %v489 = vpack.c.b16 %v393, %v391
    %v490 = vpack.c.b16 %v396, %v394
    %v491 = vpack.c.b16 %v397, %v395
    %v492 = vpack.c.b16 %v400, %v398
    %v493 = vpack.c.b16 %v401, %v399
    %v494 = vpack.c.b16 %v404, %v402
    %v495 = vpack.c.b16 %v405, %v403
    %v496 = vpack.c.b16 %v408, %v406
    %v497 = vpack.c.b16 %v409, %v407
    %v498 = vpack.c.b16 %v412, %v410
    %v499 = vpack.c.b16 %v413, %v411
    %v500 = vpack.c.b16 %v416, %v414
    %v501 = vpack.c.b16 %v417, %v415
    %v502 = vpack.c.b16 %v420, %v418
    %v503 = vpack.c.b16 %v421, %v419
    %v504 = vpack.c.b16 %v424, %v422
    %v505 = vpack.c.b16 %v425, %v423
    %v506 = vpack.c.b16 %v428, %v426
    %v507 = vpack.c.b16 %v429, %v427
    %v508 = vpack.c.b16 %v432, %v430
    %v509 = vpack.c.b16 %v433, %v431
    %v510 = vpack.c.b16 %v436, %v434
    %v511 = vpack.c.b16 %v437, %v435
    %v512 = vpack.c.b16 %v440, %v438
    %v513 = vpack.c.b16 %v441, %v439
    %v514 = vpack.c.b16 %v444, %v442
    %v515 = vpack.c.b16 %v445, %v443
    %v516 = vpack.c.b16 %v448, %v446
    %v517 = vpack.c.b16 %v449, %v447
    %v518 = vpack.c.b16 %v452, %v450
    %v519 = vpack.c.b16 %v453, %v451
    %v520 = vpack.c.b16 %v456, %v454
    %v521 = vpack.c.b16 %v457, %v455
    %586 = vmatpush.bf16.msra.mxu0 %v472
    %587 = vmatpush.bf16.msra.mxu0 %v470
    %588 = vmatpush.bf16.msra.mxu0 %v468
    %589 = vmatpush.bf16.msra.mxu0 %v466
    %590 = vmatpush.bf16.msra.mxu0 %v464
    %591 = vmatpush.bf16.msra.mxu0 %v462
    %592 = vmatpush.bf16.msra.mxu0 %v460
    %593 = vmatpush.bf16.msra.mxu0 %v458
    %594 = vmatmul.bf16.gmra.mxu0 %v193
    %v595 = vpop.f32.mrf.mxu0
    %v596 = vadd.f32 %v262, %v595
    %v597 = vpop.f32.mrf.mxu0
    %598 = vdwg.mxu0
    %599 = vmatpush.bf16.msra.mxu0 %v488
    %600 = vmatpush.bf16.msra.mxu0 %v486
    %601 = vmatpush.bf16.msra.mxu0 %v484
    %602 = vmatpush.bf16.msra.mxu0 %v482
    %603 = vmatpush.bf16.msra.mxu0 %v480
    %604 = vmatpush.bf16.msra.mxu0 %v478
    %605 = vmatpush.bf16.msra.mxu0 %v476
    %606 = vmatpush.bf16.msra.mxu0 %v474
    %607 = vmatmul.bf16.gmra.mxu0 %v194
    %v608 = vpop.f32.mrf.mxu0
    %v609 = vadd.f32 %v596, %v608
    %v610 = vpop.f32.mrf.mxu0
    %611 = vdwg.mxu0
    %612 = vmatpush.bf16.msra.mxu0 %v504
    %613 = vmatpush.bf16.msra.mxu0 %v502
    %614 = vmatpush.bf16.msra.mxu0 %v500
    %615 = vmatpush.bf16.msra.mxu0 %v498
    %616 = vmatpush.bf16.msra.mxu0 %v496
    %617 = vmatpush.bf16.msra.mxu0 %v494
    %618 = vmatpush.bf16.msra.mxu0 %v492
    %619 = vmatpush.bf16.msra.mxu0 %v490
    %620 = vmatmul.bf16.gmra.mxu0 %v195
    %v621 = vpop.f32.mrf.mxu0
    %v622 = vadd.f32 %v609, %v621
    %v623 = vpop.f32.mrf.mxu0
    %624 = vdwg.mxu0
    %625 = vmatpush.bf16.msra.mxu0 %v520
    %626 = vmatpush.bf16.msra.mxu0 %v518
    %627 = vmatpush.bf16.msra.mxu0 %v516
    %628 = vmatpush.bf16.msra.mxu0 %v514
    %629 = vmatpush.bf16.msra.mxu0 %v512
    %630 = vmatpush.bf16.msra.mxu0 %v510
    %631 = vmatpush.bf16.msra.mxu0 %v508
    %632 = vmatpush.bf16.msra.mxu0 %v506
    %633 = vmatmul.bf16.gmra.mxu0 %v196
    %v634 = vpop.f32.mrf.mxu0
    %v635 = vadd.f32 %v622, %v634
    %v636 = vpop.f32.mrf.mxu0
    %637 = vdwg.mxu0
    %638 = vmatpush.bf16.msra.mxu0 %v473
    %639 = vmatpush.bf16.msra.mxu0 %v471
    %640 = vmatpush.bf16.msra.mxu0 %v469
    %641 = vmatpush.bf16.msra.mxu0 %v467
    %642 = vmatpush.bf16.msra.mxu0 %v465
    %643 = vmatpush.bf16.msra.mxu0 %v463
    %644 = vmatpush.bf16.msra.mxu0 %v461
    %645 = vmatpush.bf16.msra.mxu0 %v459
    %646 = vmatmul.bf16.gmra.mxu0 %v193
    %v647 = vpop.f32.mrf.mxu0
    %v648 = vadd.f32 %v263, %v647
    %v649 = vpop.f32.mrf.mxu0
    %650 = vdwg.mxu0
    %651 = vmatpush.bf16.msra.mxu0 %v489
    %652 = vmatpush.bf16.msra.mxu0 %v487
    %653 = vmatpush.bf16.msra.mxu0 %v485
    %654 = vmatpush.bf16.msra.mxu0 %v483
    %655 = vmatpush.bf16.msra.mxu0 %v481
    %656 = vmatpush.bf16.msra.mxu0 %v479
    %657 = vmatpush.bf16.msra.mxu0 %v477
    %658 = vmatpush.bf16.msra.mxu0 %v475
    %659 = vmatmul.bf16.gmra.mxu0 %v194
    %v660 = vpop.f32.mrf.mxu0
    %v661 = vadd.f32 %v648, %v660
    %v662 = vpop.f32.mrf.mxu0
    %663 = vdwg.mxu0
    %664 = vmatpush.bf16.msra.mxu0 %v505
    %665 = vmatpush.bf16.msra.mxu0 %v503
    %666 = vmatpush.bf16.msra.mxu0 %v501
    %667 = vmatpush.bf16.msra.mxu0 %v499
    %668 = vmatpush.bf16.msra.mxu0 %v497
    %669 = vmatpush.bf16.msra.mxu0 %v495
    %670 = vmatpush.bf16.msra.mxu0 %v493
    %671 = vmatpush.bf16.msra.mxu0 %v491
    %672 = vmatmul.bf16.gmra.mxu0 %v195
    %v673 = vpop.f32.mrf.mxu0
    %v674 = vadd.f32 %v661, %v673
    %v675 = vpop.f32.mrf.mxu0
    %676 = vdwg.mxu0
    %677 = vmatpush.bf16.msra.mxu0 %v521
    %678 = vmatpush.bf16.msra.mxu0 %v519
    %679 = vmatpush.bf16.msra.mxu0 %v517
    %680 = vmatpush.bf16.msra.mxu0 %v515
    %681 = vmatpush.bf16.msra.mxu0 %v513
    %682 = vmatpush.bf16.msra.mxu0 %v511
    %683 = vmatpush.bf16.msra.mxu0 %v509
    %684 = vmatpush.bf16.msra.mxu0 %v507
    %685 = vmatmul.bf16.gmra.mxu0 %v196
    %v686 = vpop.f32.mrf.mxu0
    %v687 = vadd.f32 %v674, %v686
    %v688 = vpop.f32.mrf.mxu0
    %689 = vdwg.mxu0
    %v690 = vtanh.pop %v635
    %v691 = vtanh.pop %v687
    %v692 = vld [vmem:[%s10 + $0x2] ss:$0 sm:$0xff]
    %v693 = vpack.c.bf16 %v690, %v690
    %v694 = vpack.c.bf16 %v691, %v691
    %v695 = vld [vmem:[%s3] sm:$0xf]
    %v696 = vld [vmem:[%s3 + $0x4] sm:$0xf]
    %v697 = vld [vmem:[%s3 + $0x8] sm:$0xf]
    %v698 = vld [vmem:[%s3 + $0xc] sm:$0xf]
    %v699 = vld [vmem:[%s3 + $0x10] sm:$0xf]
    %v700 = vld [vmem:[%s3 + $0x14] sm:$0xf]
    %v701 = vld [vmem:[%s3 + $0x18] sm:$0xf]
    %v702 = vld [vmem:[%s3 + $0x1c] sm:$0xf]
    %v703 = vld [vmem:[%s3 + $0x20] sm:$0xf]
    %v704 = vld [vmem:[%s3 + $0x24] sm:$0xf]
    %v705 = vld [vmem:[%s3 + $0x28] sm:$0xf]
    %v706 = vld [vmem:[%s3 + $0x2c] sm:$0xf]
    %v707 = vld [vmem:[%s3 + $0x30] sm:$0xf]
    %v708 = vld [vmem:[%s3 + $0x34] sm:$0xf]
    %v709 = vld [vmem:[%s3 + $0x38] sm:$0xf]
    %v710 = vld [vmem:[%s3 + $0x3c] sm:$0xf]
    %v711 = vld [vmem:[%s3 + $0x40] sm:$0xf]
    %v712 = vld [vmem:[%s3 + $0x44] sm:$0xf]
    %v713 = vld [vmem:[%s3 + $0x48] sm:$0xf]
    %v714 = vld [vmem:[%s3 + $0x4c] sm:$0xf]
    %v715 = vld [vmem:[%s3 + $0x50] sm:$0xf]
    %v716 = vld [vmem:[%s3 + $0x54] sm:$0xf]
    %v717 = vld [vmem:[%s3 + $0x58] sm:$0xf]
    %v718 = vld [vmem:[%s3 + $0x5c] sm:$0xf]
    %v719 = vld [vmem:[%s3 + $0x60] sm:$0xf]
    %v720 = vld [vmem:[%s3 + $0x64] sm:$0xf]
    %v721 = vld [vmem:[%s3 + $0x68] sm:$0xf]
    %v722 = vld [vmem:[%s3 + $0x6c] sm:$0xf]
    %v723 = vld [vmem:[%s3 + $0x70] sm:$0xf]
    %v724 = vld [vmem:[%s3 + $0x74] sm:$0xf]
    %v725 = vld [vmem:[%s3 + $0x78] sm:$0xf]
    %v726 = vld [vmem:[%s3 + $0x7c] sm:$0xf]
    %v759 = vunpack.c.l.b16 %v695
    %v760 = vunpack.c.l.b16 %v696
    %v761 = vunpack.c.l.b16 %v697
    %v762 = vunpack.c.l.b16 %v698
    %v763 = vunpack.c.l.b16 %v699
    %v764 = vunpack.c.l.b16 %v700
    %v765 = vunpack.c.l.b16 %v701
    %v766 = vunpack.c.l.b16 %v702
    %v767 = vunpack.c.l.b16 %v703
    %v768 = vunpack.c.l.b16 %v704
    %v769 = vunpack.c.l.b16 %v705
    %v770 = vunpack.c.l.b16 %v706
    %v771 = vunpack.c.l.b16 %v707
    %v772 = vunpack.c.l.b16 %v708
    %v773 = vunpack.c.l.b16 %v709
    %v774 = vunpack.c.l.b16 %v710
    %v775 = vunpack.c.l.b16 %v711
    %v776 = vunpack.c.l.b16 %v712
    %v777 = vunpack.c.l.b16 %v713
    %v778 = vunpack.c.l.b16 %v714
    %v779 = vunpack.c.l.b16 %v715
    %v780 = vunpack.c.l.b16 %v716
    %v781 = vunpack.c.l.b16 %v717
    %v782 = vunpack.c.l.b16 %v718
    %v783 = vunpack.c.l.b16 %v719
    %v784 = vunpack.c.l.b16 %v720
    %v785 = vunpack.c.l.b16 %v721
    %v786 = vunpack.c.l.b16 %v722
    %v787 = vunpack.c.l.b16 %v723
    %v788 = vunpack.c.l.b16 %v724
    %v789 = vunpack.c.l.b16 %v725
    %v790 = vunpack.c.l.b16 %v726
    %v791 = vpack.c.b16 %v760, %v759
    %v792 = vpack.c.b16 %v762, %v761
    %v793 = vpack.c.b16 %v764, %v763
    %v794 = vpack.c.b16 %v766, %v765
    %v795 = vpack.c.b16 %v768, %v767
    %v796 = vpack.c.b16 %v770, %v769
    %v797 = vpack.c.b16 %v772, %v771
    %v798 = vpack.c.b16 %v774, %v773
    %v799 = vpack.c.b16 %v776, %v775
    %v800 = vpack.c.b16 %v778, %v777
    %v801 = vpack.c.b16 %v780, %v779
    %v802 = vpack.c.b16 %v782, %v781
    %v803 = vpack.c.b16 %v784, %v783
    %v804 = vpack.c.b16 %v786, %v785
    %v805 = vpack.c.b16 %v788, %v787
    %v806 = vpack.c.b16 %v790, %v789
    %823 = vmatpush.bf16.msra.mxu0 %v798
    %824 = vmatpush.bf16.msra.mxu0 %v797
    %825 = vmatpush.bf16.msra.mxu0 %v796
    %826 = vmatpush.bf16.msra.mxu0 %v795
    %827 = vmatpush.bf16.msra.mxu0 %v794
    %828 = vmatpush.bf16.msra.mxu0 %v793
    %829 = vmatpush.bf16.msra.mxu0 %v792
    %830 = vmatpush.bf16.msra.mxu0 %v791
    %831 = vmatmul.bf16.gmra.mxu0 %v693
    %v832 = vpop.f32.mrf.mxu0
    %v833 = vadd.f32 %v692, %v832
    %v834 = vpop.f32.mrf.mxu0
    %835 = vdwg.mxu0
    %836 = vmatpush.bf16.msra.mxu0 %v806
    %837 = vmatpush.bf16.msra.mxu0 %v805
    %838 = vmatpush.bf16.msra.mxu0 %v804
    %839 = vmatpush.bf16.msra.mxu0 %v803
    %840 = vmatpush.bf16.msra.mxu0 %v802
    %841 = vmatpush.bf16.msra.mxu0 %v801
    %842 = vmatpush.bf16.msra.mxu0 %v800
    %843 = vmatpush.bf16.msra.mxu0 %v799
    %844 = vmatmul.bf16.gmra.mxu0 %v694
    %v845 = vpop.f32.mrf.mxu0
    %v846 = vadd.f32 %v833, %v845
    %v847 = vpop.f32.mrf.mxu0
    %848 = vdwg.mxu0
    %v849 = vtanh.pop %v846
    %v850 = vld [vmem:[%s10 + $0x3] ss:$0 sm:$0xff]
    %v851 = vpack.c.bf16 %v849, %v849
    %v852 = vld [vmem:[%s4] sm:$0xf]
    %v853 = vld [vmem:[%s4 + $0x4] sm:$0xf]
    %v854 = vld [vmem:[%s4 + $0x8] sm:$0xf]
    %v855 = vld [vmem:[%s4 + $0xc] sm:$0xf]
    %v856 = vld [vmem:[%s4 + $0x10] sm:$0xf]
    %v857 = vld [vmem:[%s4 + $0x14] sm:$0xf]
    %v858 = vld [vmem:[%s4 + $0x18] sm:$0xf]
    %v859 = vld [vmem:[%s4 + $0x1c] sm:$0xf]
    %v860 = vld [vmem:[%s4 + $0x20] sm:$0xf]
    %v861 = vld [vmem:[%s4 + $0x24] sm:$0xf]
    %v862 = vld [vmem:[%s4 + $0x28] sm:$0xf]
    %v863 = vld [vmem:[%s4 + $0x2c] sm:$0xf]
    %v864 = vld [vmem:[%s4 + $0x30] sm:$0xf]
    %v865 = vld [vmem:[%s4 + $0x34] sm:$0xf]
    %v866 = vld [vmem:[%s4 + $0x38] sm:$0xf]
    %v867 = vld [vmem:[%s4 + $0x3c] sm:$0xf]
    %v884 = vunpack.c.l.b16 %v852
    %v885 = vunpack.c.l.b16 %v853
    %v886 = vunpack.c.l.b16 %v854
    %v887 = vunpack.c.l.b16 %v855
    %v888 = vunpack.c.l.b16 %v856
    %v889 = vunpack.c.l.b16 %v857
    %v890 = vunpack.c.l.b16 %v858
    %v891 = vunpack.c.l.b16 %v859
    %v892 = vunpack.c.l.b16 %v860
    %v893 = vunpack.c.l.b16 %v861
    %v894 = vunpack.c.l.b16 %v862
    %v895 = vunpack.c.l.b16 %v863
    %v896 = vunpack.c.l.b16 %v864
    %v897 = vunpack.c.l.b16 %v865
    %v898 = vunpack.c.l.b16 %v866
    %v899 = vunpack.c.l.b16 %v867
    %v900 = vpack.c.b16 %v885, %v884
    %v901 = vpack.c.b16 %v887, %v886
    %v902 = vpack.c.b16 %v889, %v888
    %v903 = vpack.c.b16 %v891, %v890
    %v904 = vpack.c.b16 %v893, %v892
    %v905 = vpack.c.b16 %v895, %v894
    %v906 = vpack.c.b16 %v897, %v896
    %v907 = vpack.c.b16 %v899, %v898
    %916 = vmatpush.bf16.msra.mxu0 %v907
    %917 = vmatpush.bf16.msra.mxu0 %v906
    %918 = vmatpush.bf16.msra.mxu0 %v905
    %919 = vmatpush.bf16.msra.mxu0 %v904
    %920 = vmatpush.bf16.msra.mxu0 %v903
    %921 = vmatpush.bf16.msra.mxu0 %v902
    %922 = vmatpush.bf16.msra.mxu0 %v901
    %923 = vmatpush.bf16.msra.mxu0 %v900
    %924 = vmatmul.bf16.gmra.mxu0 %v851
    %v925 = vpop.f32.mrf.mxu0
    %v926 = vadd.f32 %v850, %v925
    %v927 = vpop.f32.mrf.mxu0
    %928 = vdwg.mxu0
    %s929 = scalar_lea.vmem %s10, 4
    %v930 = vld [vmem:[%s929] ss:$8 sm:$0x3]
    %v931 = vpack.c.bf16 %v926, %v926
    %v932 = vld [vmem:[%s5] sm:$0x3]
    %v934 = vperm.slane %v930, 0
    %v935 = vperm.slane %v930, 1
    %939 = vst [vmem:[#allocation1] ss:$9 sm:$0xff] %v932
    %v940 = vld [vmem:[#allocation1] sm:$0xff]
    %v941 = vld [vmem:[#allocation1 + $0x9] sm:$0xff]
    %vm942 = vcmask 15360
    %v944 = vsel %vm942, %v931, 0
    %vm946 = vcmask 1040384
    %v947 = vsel %vm946, %v940, 0
    %v949 = vsel %vm946, %v941, 0
    %951 = vmatpush.bf16.msra.mxu0 0
    %952 = vmatpush.bf16.msra.mxu0 0
    %953 = vmatpush.bf16.msra.mxu0 0
    %954 = vmatpush.bf16.msra.mxu0 0
    %955 = vmatpush.bf16.msra.mxu0 0
    %956 = vmatpush.bf16.msra.mxu0 0
    %957 = vmatpush.bf16.msra.mxu0 0
    %958 = vmatpush.bf16.msra.mxu0 %v947
    %959 = vmatmul.bf16.gmra.mxu0 %v944
    %v960 = vpop.f32.mrf.mxu0
    %v961 = vadd.f32 %v934, %v960
    %v962 = vpop.f32.mrf.mxu0
    %963 = vdwg.mxu0
    %964 = vmatpush.bf16.msra.mxu0 0
    %965 = vmatpush.bf16.msra.mxu0 0
    %966 = vmatpush.bf16.msra.mxu0 0
    %967 = vmatpush.bf16.msra.mxu0 0
    %968 = vmatpush.bf16.msra.mxu0 0
    %969 = vmatpush.bf16.msra.mxu0 0
    %970 = vmatpush.bf16.msra.mxu0 0
    %971 = vmatpush.bf16.msra.mxu0 %v949
    %972 = vmatmul.bf16.gmra.mxu0 %v944
    %v973 = vpop.f32.mrf.mxu0
    %v974 = vadd.f32 %v935, %v973
    %v975 = vpop.f32.mrf.mxu0
    %976 = vdwg.mxu0
    %v977 = vtanh.pop %v961
    %v978 = vtanh.pop %v974
    %s979 = scalar_lea.vmem %s10, 5
    %v980 = vld [vmem:[%s979] ss:$8 sm:$0x3]
    %v981 = vpack.c.bf16 %v977, %v977
    %v982 = vld [vmem:[%s6] sm:$0xff]
    %v983 = vld [vmem:[%s6 + $0x8] sm:$0xff]
    %v984 = vld [vmem:[%s6 + $0x10] sm:$0xff]
    %v985 = vld [vmem:[%s6 + $0x18] sm:$0xff]
    %v986 = vld [vmem:[%s6 + $0x20] sm:$0xff]
    %v987 = vld [vmem:[%s6 + $0x28] sm:$0xff]
    %v988 = vld [vmem:[%s6 + $0x30] sm:$0xff]
    %v989 = vld [vmem:[%s6 + $0x38] sm:$0xff]
    %v990 = vld [vmem:[%s6 + $0x40] sm:$0xff]
    %v991 = vld [vmem:[%s6 + $0x48] sm:$0xff]
    %v992 = vld [vmem:[%s6 + $0x50] sm:$0xff]
    %v993 = vld [vmem:[%s6 + $0x58] sm:$0xff]
    %v994 = vld [vmem:[%s6 + $0x60] sm:$0xff]
    %v995 = vld [vmem:[%s6 + $0x68] sm:$0xff]
    %v996 = vld [vmem:[%s6 + $0x70] sm:$0xff]
    %v997 = vld [vmem:[%s6 + $0x78] sm:$0xff]
    %v999 = vperm.slane %v980, 0
    %v1000 = vperm.slane %v980, 1
    %v1019 = vunpack.c.l.b16 %v982
    %v1020 = vunpack.c.h.b16 %v982
    %v1021 = vunpack.c.l.b16 %v983
    %v1022 = vunpack.c.h.b16 %v983
    %v1023 = vunpack.c.l.b16 %v984
    %v1024 = vunpack.c.h.b16 %v984
    %v1025 = vunpack.c.l.b16 %v985
    %v1026 = vunpack.c.h.b16 %v985
    %v1027 = vunpack.c.l.b16 %v986
    %v1028 = vunpack.c.h.b16 %v986
    %v1029 = vunpack.c.l.b16 %v987
    %v1030 = vunpack.c.h.b16 %v987
    %v1031 = vunpack.c.l.b16 %v988
    %v1032 = vunpack.c.h.b16 %v988
    %v1033 = vunpack.c.l.b16 %v989
    %v1034 = vunpack.c.h.b16 %v989
    %v1035 = vunpack.c.l.b16 %v990
    %v1036 = vunpack.c.h.b16 %v990
    %v1037 = vunpack.c.l.b16 %v991
    %v1038 = vunpack.c.h.b16 %v991
    %v1039 = vunpack.c.l.b16 %v992
    %v1040 = vunpack.c.h.b16 %v992
    %v1041 = vunpack.c.l.b16 %v993
    %v1042 = vunpack.c.h.b16 %v993
    %v1043 = vunpack.c.l.b16 %v994
    %v1044 = vunpack.c.h.b16 %v994
    %v1045 = vunpack.c.l.b16 %v995
    %v1046 = vunpack.c.h.b16 %v995
    %v1047 = vunpack.c.l.b16 %v996
    %v1048 = vunpack.c.h.b16 %v996
    %v1049 = vunpack.c.l.b16 %v997
    %v1050 = vunpack.c.h.b16 %v997
    %v1051 = vpack.c.b16 %v1021, %v1019
    %v1052 = vpack.c.b16 %v1022, %v1020
    %v1053 = vpack.c.b16 %v1025, %v1023
    %v1054 = vpack.c.b16 %v1026, %v1024
    %v1055 = vpack.c.b16 %v1029, %v1027
    %v1056 = vpack.c.b16 %v1030, %v1028
    %v1057 = vpack.c.b16 %v1033, %v1031
    %v1058 = vpack.c.b16 %v1034, %v1032
    %v1059 = vpack.c.b16 %v1037, %v1035
    %v1060 = vpack.c.b16 %v1038, %v1036
    %v1061 = vpack.c.b16 %v1041, %v1039
    %v1062 = vpack.c.b16 %v1042, %v1040
    %v1063 = vpack.c.b16 %v1045, %v1043
    %v1064 = vpack.c.b16 %v1046, %v1044
    %v1065 = vpack.c.b16 %v1049, %v1047
    %v1066 = vpack.c.b16 %v1050, %v1048
    %1083 = vmatpush.bf16.msra.mxu0 %v1065
    %1084 = vmatpush.bf16.msra.mxu0 %v1063
    %1085 = vmatpush.bf16.msra.mxu0 %v1061
    %1086 = vmatpush.bf16.msra.mxu0 %v1059
    %1087 = vmatpush.bf16.msra.mxu0 %v1057
    %1088 = vmatpush.bf16.msra.mxu0 %v1055
    %1089 = vmatpush.bf16.msra.mxu0 %v1053
    %1090 = vmatpush.bf16.msra.mxu0 %v1051
    %1091 = vmatmul.bf16.gmra.mxu0 %v981
    %v1092 = vpop.f32.mrf.mxu0
    %v1093 = vadd.f32 %v999, %v1092
    %v1094 = vpop.f32.mrf.mxu0
    %1095 = vdwg.mxu0
    %1096 = vmatpush.bf16.msra.mxu0 %v1066
    %1097 = vmatpush.bf16.msra.mxu0 %v1064
    %1098 = vmatpush.bf16.msra.mxu0 %v1062
    %1099 = vmatpush.bf16.msra.mxu0 %v1060
    %1100 = vmatpush.bf16.msra.mxu0 %v1058
    %1101 = vmatpush.bf16.msra.mxu0 %v1056
    %1102 = vmatpush.bf16.msra.mxu0 %v1054
    %1103 = vmatpush.bf16.msra.mxu0 %v1052
    %1104 = vmatmul.bf16.gmra.mxu0 %v981
    %v1105 = vpop.f32.mrf.mxu0
    %v1106 = vadd.f32 %v1000, %v1105
    %v1107 = vpop.f32.mrf.mxu0
    %1108 = vdwg.mxu0
    %v1109 = vtanh.pop %v1093
    %v1110 = vtanh.pop %v1106
    %s1111 = scalar_lea.vmem %s10, 6
    %v1112 = vld [vmem:[%s1111] ss:$8 sm:$0xf]
    %v1113 = vpack.c.bf16 %v1109, %v1109
    %v1114 = vpack.c.bf16 %v1110, %v1110
    %v1115 = vld [vmem:[#allocation4] sm:$0xff]
    %v1116 = vld [vmem:[#allocation4 + $0x8] sm:$0xff]
    %v1117 = vld [vmem:[#allocation4 + $0x10] sm:$0xff]
    %v1118 = vld [vmem:[#allocation4 + $0x18] sm:$0xff]
    %v1119 = vld [vmem:[#allocation4 + $0x20] sm:$0xff]
    %v1120 = vld [vmem:[#allocation4 + $0x28] sm:$0xff]
    %v1121 = vld [vmem:[#allocation4 + $0x30] sm:$0xff]
    %v1122 = vld [vmem:[#allocation4 + $0x38] sm:$0xff]
    %v1123 = vld [vmem:[#allocation4 + $0x40] sm:$0xff]
    %v1124 = vld [vmem:[#allocation4 + $0x48] sm:$0xff]
    %v1125 = vld [vmem:[#allocation4 + $0x50] sm:$0xff]
    %v1126 = vld [vmem:[#allocation4 + $0x58] sm:$0xff]
    %v1127 = vld [vmem:[#allocation4 + $0x60] sm:$0xff]
    %v1128 = vld [vmem:[#allocation4 + $0x68] sm:$0xff]
    %v1129 = vld [vmem:[#allocation4 + $0x70] sm:$0xff]
    %v1130 = vld [vmem:[#allocation4 + $0x78] sm:$0xff]
    %v1131 = vld [vmem:[#allocation4 + $0x80] sm:$0xff]
    %v1132 = vld [vmem:[#allocation4 + $0x88] sm:$0xff]
    %v1133 = vld [vmem:[#allocation4 + $0x90] sm:$0xff]
    %v1134 = vld [vmem:[#allocation4 + $0x98] sm:$0xff]
    %v1135 = vld [vmem:[#allocation4 + $0xa0] sm:$0xff]
    %v1136 = vld [vmem:[#allocation4 + $0xa8] sm:$0xff]
    %v1137 = vld [vmem:[#allocation4 + $0xb0] sm:$0xff]
    %v1138 = vld [vmem:[#allocation4 + $0xb8] sm:$0xff]
    %v1139 = vld [vmem:[#allocation4 + $0xc0] sm:$0xff]
    %v1140 = vld [vmem:[#allocation4 + $0xc8] sm:$0xff]
    %v1141 = vld [vmem:[#allocation4 + $0xd0] sm:$0xff]
    %v1142 = vld [vmem:[#allocation4 + $0xd8] sm:$0xff]
    %v1143 = vld [vmem:[#allocation4 + $0xe0] sm:$0xff]
    %v1144 = vld [vmem:[#allocation4 + $0xe8] sm:$0xff]
    %v1145 = vld [vmem:[#allocation4 + $0xf0] sm:$0xff]
    %v1146 = vld [vmem:[#allocation4 + $0xf8] sm:$0xff]
    %v1147 = vld [vmem:[#allocation4 + $0x100] sm:$0xff]
    %v1148 = vld [vmem:[#allocation4 + $0x108] sm:$0xff]
    %v1149 = vld [vmem:[#allocation4 + $0x110] sm:$0xff]
    %v1150 = vld [vmem:[#allocation4 + $0x118] sm:$0xff]
    %v1151 = vld [vmem:[#allocation4 + $0x120] sm:$0xff]
    %v1152 = vld [vmem:[#allocation4 + $0x128] sm:$0xff]
    %v1153 = vld [vmem:[#allocation4 + $0x130] sm:$0xff]
    %v1154 = vld [vmem:[#allocation4 + $0x138] sm:$0xff]
    %v1155 = vld [vmem:[#allocation4 + $0x140] sm:$0xff]
    %v1156 = vld [vmem:[#allocation4 + $0x148] sm:$0xff]
    %v1157 = vld [vmem:[#allocation4 + $0x150] sm:$0xff]
    %v1158 = vld [vmem:[#allocation4 + $0x158] sm:$0xff]
    %v1159 = vld [vmem:[#allocation4 + $0x160] sm:$0xff]
    %v1160 = vld [vmem:[#allocation4 + $0x168] sm:$0xff]
    %v1161 = vld [vmem:[#allocation4 + $0x170] sm:$0xff]
    %v1162 = vld [vmem:[#allocation4 + $0x178] sm:$0xff]
    %v1163 = vld [vmem:[#allocation4 + $0x180] sm:$0xff]
    %v1164 = vld [vmem:[#allocation4 + $0x188] sm:$0xff]
    %v1165 = vld [vmem:[#allocation4 + $0x190] sm:$0xff]
    %v1166 = vld [vmem:[#allocation4 + $0x198] sm:$0xff]
    %v1167 = vld [vmem:[#allocation4 + $0x1a0] sm:$0xff]
    %v1168 = vld [vmem:[#allocation4 + $0x1a8] sm:$0xff]
    %v1169 = vld [vmem:[#allocation4 + $0x1b0] sm:$0xff]
    %v1170 = vld [vmem:[#allocation4 + $0x1b8] sm:$0xff]
    %v1171 = vld [vmem:[#allocation4 + $0x1c0] sm:$0xff]
    %v1172 = vld [vmem:[#allocation4 + $0x1c8] sm:$0xff]
    %v1173 = vld [vmem:[#allocation4 + $0x1d0] sm:$0xff]
    %v1174 = vld [vmem:[#allocation4 + $0x1d8] sm:$0xff]
    %v1175 = vld [vmem:[#allocation4 + $0x1e0] sm:$0xff]
    %v1176 = vld [vmem:[#allocation4 + $0x1e8] sm:$0xff]
    %v1177 = vld [vmem:[#allocation4 + $0x1f0] sm:$0xff]
    %v1178 = vld [vmem:[#allocation4 + $0x1f8] sm:$0xff]
    %v1180 = vperm.slane %v1112, 0
    %v1181 = vperm.slane %v1112, 1
    %v1182 = vperm.slane %v1112, 2
    %v1183 = vperm.slane %v1112, 3
    %v1252 = vunpack.c.l.b16 %v1115
    %v1253 = vunpack.c.h.b16 %v1115
    %v1254 = vunpack.c.l.b16 %v1116
    %v1255 = vunpack.c.h.b16 %v1116
    %v1256 = vunpack.c.l.b16 %v1117
    %v1257 = vunpack.c.h.b16 %v1117
    %v1258 = vunpack.c.l.b16 %v1118
    %v1259 = vunpack.c.h.b16 %v1118
    %v1260 = vunpack.c.l.b16 %v1119
    %v1261 = vunpack.c.h.b16 %v1119
    %v1262 = vunpack.c.l.b16 %v1120
    %v1263 = vunpack.c.h.b16 %v1120
    %v1264 = vunpack.c.l.b16 %v1121
    %v1265 = vunpack.c.h.b16 %v1121
    %v1266 = vunpack.c.l.b16 %v1122
    %v1267 = vunpack.c.h.b16 %v1122
    %v1268 = vunpack.c.l.b16 %v1123
    %v1269 = vunpack.c.h.b16 %v1123
    %v1270 = vunpack.c.l.b16 %v1124
    %v1271 = vunpack.c.h.b16 %v1124
    %v1272 = vunpack.c.l.b16 %v1125
    %v1273 = vunpack.c.h.b16 %v1125
    %v1274 = vunpack.c.l.b16 %v1126
    %v1275 = vunpack.c.h.b16 %v1126
    %v1276 = vunpack.c.l.b16 %v1127
    %v1277 = vunpack.c.h.b16 %v1127
    %v1278 = vunpack.c.l.b16 %v1128
    %v1279 = vunpack.c.h.b16 %v1128
    %v1280 = vunpack.c.l.b16 %v1129
    %v1281 = vunpack.c.h.b16 %v1129
    %v1282 = vunpack.c.l.b16 %v1130
    %v1283 = vunpack.c.h.b16 %v1130
    %v1284 = vunpack.c.l.b16 %v1131
    %v1285 = vunpack.c.h.b16 %v1131
    %v1286 = vunpack.c.l.b16 %v1132
    %v1287 = vunpack.c.h.b16 %v1132
    %v1288 = vunpack.c.l.b16 %v1133
    %v1289 = vunpack.c.h.b16 %v1133
    %v1290 = vunpack.c.l.b16 %v1134
    %v1291 = vunpack.c.h.b16 %v1134
    %v1292 = vunpack.c.l.b16 %v1135
    %v1293 = vunpack.c.h.b16 %v1135
    %v1294 = vunpack.c.l.b16 %v1136
    %v1295 = vunpack.c.h.b16 %v1136
    %v1296 = vunpack.c.l.b16 %v1137
    %v1297 = vunpack.c.h.b16 %v1137
    %v1298 = vunpack.c.l.b16 %v1138
    %v1299 = vunpack.c.h.b16 %v1138
    %v1300 = vunpack.c.l.b16 %v1139
    %v1301 = vunpack.c.h.b16 %v1139
    %v1302 = vunpack.c.l.b16 %v1140
    %v1303 = vunpack.c.h.b16 %v1140
    %v1304 = vunpack.c.l.b16 %v1141
    %v1305 = vunpack.c.h.b16 %v1141
    %v1306 = vunpack.c.l.b16 %v1142
    %v1307 = vunpack.c.h.b16 %v1142
    %v1308 = vunpack.c.l.b16 %v1143
    %v1309 = vunpack.c.h.b16 %v1143
    %v1310 = vunpack.c.l.b16 %v1144
    %v1311 = vunpack.c.h.b16 %v1144
    %v1312 = vunpack.c.l.b16 %v1145
    %v1313 = vunpack.c.h.b16 %v1145
    %v1314 = vunpack.c.l.b16 %v1146
    %v1315 = vunpack.c.h.b16 %v1146
    %v1316 = vunpack.c.l.b16 %v1147
    %v1317 = vunpack.c.h.b16 %v1147
    %v1318 = vunpack.c.l.b16 %v1148
    %v1319 = vunpack.c.h.b16 %v1148
    %v1320 = vunpack.c.l.b16 %v1149
    %v1321 = vunpack.c.h.b16 %v1149
    %v1322 = vunpack.c.l.b16 %v1150
    %v1323 = vunpack.c.h.b16 %v1150
    %v1324 = vunpack.c.l.b16 %v1151
    %v1325 = vunpack.c.h.b16 %v1151
    %v1326 = vunpack.c.l.b16 %v1152
    %v1327 = vunpack.c.h.b16 %v1152
    %v1328 = vunpack.c.l.b16 %v1153
    %v1329 = vunpack.c.h.b16 %v1153
    %v1330 = vunpack.c.l.b16 %v1154
    %v1331 = vunpack.c.h.b16 %v1154
    %v1332 = vunpack.c.l.b16 %v1155
    %v1333 = vunpack.c.h.b16 %v1155
    %v1334 = vunpack.c.l.b16 %v1156
    %v1335 = vunpack.c.h.b16 %v1156
    %v1336 = vunpack.c.l.b16 %v1157
    %v1337 = vunpack.c.h.b16 %v1157
    %v1338 = vunpack.c.l.b16 %v1158
    %v1339 = vunpack.c.h.b16 %v1158
    %v1340 = vunpack.c.l.b16 %v1159
    %v1341 = vunpack.c.h.b16 %v1159
    %v1342 = vunpack.c.l.b16 %v1160
    %v1343 = vunpack.c.h.b16 %v1160
    %v1344 = vunpack.c.l.b16 %v1161
    %v1345 = vunpack.c.h.b16 %v1161
    %v1346 = vunpack.c.l.b16 %v1162
    %v1347 = vunpack.c.h.b16 %v1162
    %v1348 = vunpack.c.l.b16 %v1163
    %v1349 = vunpack.c.h.b16 %v1163
    %v1350 = vunpack.c.l.b16 %v1164
    %v1351 = vunpack.c.h.b16 %v1164
    %v1352 = vunpack.c.l.b16 %v1165
    %v1353 = vunpack.c.h.b16 %v1165
    %v1354 = vunpack.c.l.b16 %v1166
    %v1355 = vunpack.c.h.b16 %v1166
    %v1356 = vunpack.c.l.b16 %v1167
    %v1357 = vunpack.c.h.b16 %v1167
    %v1358 = vunpack.c.l.b16 %v1168
    %v1359 = vunpack.c.h.b16 %v1168
    %v1360 = vunpack.c.l.b16 %v1169
    %v1361 = vunpack.c.h.b16 %v1169
    %v1362 = vunpack.c.l.b16 %v1170
    %v1363 = vunpack.c.h.b16 %v1170
    %v1364 = vunpack.c.l.b16 %v1171
    %v1365 = vunpack.c.h.b16 %v1171
    %v1366 = vunpack.c.l.b16 %v1172
    %v1367 = vunpack.c.h.b16 %v1172
    %v1368 = vunpack.c.l.b16 %v1173
    %v1369 = vunpack.c.h.b16 %v1173
    %v1370 = vunpack.c.l.b16 %v1174
    %v1371 = vunpack.c.h.b16 %v1174
    %v1372 = vunpack.c.l.b16 %v1175
    %v1373 = vunpack.c.h.b16 %v1175
    %v1374 = vunpack.c.l.b16 %v1176
    %v1375 = vunpack.c.h.b16 %v1176
    %v1376 = vunpack.c.l.b16 %v1177
    %v1377 = vunpack.c.h.b16 %v1177
    %v1378 = vunpack.c.l.b16 %v1178
    %v1379 = vunpack.c.h.b16 %v1178
    %v1380 = vpack.c.b16 %v1256, %v1252
    %v1381 = vpack.c.b16 %v1257, %v1253
    %v1382 = vpack.c.b16 %v1258, %v1254
    %v1383 = vpack.c.b16 %v1259, %v1255
    %v1384 = vpack.c.b16 %v1264, %v1260
    %v1385 = vpack.c.b16 %v1265, %v1261
    %v1386 = vpack.c.b16 %v1266, %v1262
    %v1387 = vpack.c.b16 %v1267, %v1263
    %v1388 = vpack.c.b16 %v1272, %v1268
    %v1389 = vpack.c.b16 %v1273, %v1269
    %v1390 = vpack.c.b16 %v1274, %v1270
    %v1391 = vpack.c.b16 %v1275, %v1271
    %v1392 = vpack.c.b16 %v1280, %v1276
    %v1393 = vpack.c.b16 %v1281, %v1277
    %v1394 = vpack.c.b16 %v1282, %v1278
    %v1395 = vpack.c.b16 %v1283, %v1279
    %v1396 = vpack.c.b16 %v1288, %v1284
    %v1397 = vpack.c.b16 %v1289, %v1285
    %v1398 = vpack.c.b16 %v1290, %v1286
    %v1399 = vpack.c.b16 %v1291, %v1287
    %v1400 = vpack.c.b16 %v1296, %v1292
    %v1401 = vpack.c.b16 %v1297, %v1293
    %v1402 = vpack.c.b16 %v1298, %v1294
    %v1403 = vpack.c.b16 %v1299, %v1295
    %v1404 = vpack.c.b16 %v1304, %v1300
    %v1405 = vpack.c.b16 %v1305, %v1301
    %v1406 = vpack.c.b16 %v1306, %v1302
    %v1407 = vpack.c.b16 %v1307, %v1303
    %v1408 = vpack.c.b16 %v1312, %v1308
    %v1409 = vpack.c.b16 %v1313, %v1309
    %v1410 = vpack.c.b16 %v1314, %v1310
    %v1411 = vpack.c.b16 %v1315, %v1311
    %v1412 = vpack.c.b16 %v1320, %v1316
    %v1413 = vpack.c.b16 %v1321, %v1317
    %v1414 = vpack.c.b16 %v1322, %v1318
    %v1415 = vpack.c.b16 %v1323, %v1319
    %v1416 = vpack.c.b16 %v1328, %v1324
    %v1417 = vpack.c.b16 %v1329, %v1325
    %v1418 = vpack.c.b16 %v1330, %v1326
    %v1419 = vpack.c.b16 %v1331, %v1327
    %v1420 = vpack.c.b16 %v1336, %v1332
    %v1421 = vpack.c.b16 %v1337, %v1333
    %v1422 = vpack.c.b16 %v1338, %v1334
    %v1423 = vpack.c.b16 %v1339, %v1335
    %v1424 = vpack.c.b16 %v1344, %v1340
    %v1425 = vpack.c.b16 %v1345, %v1341
    %v1426 = vpack.c.b16 %v1346, %v1342
    %v1427 = vpack.c.b16 %v1347, %v1343
    %v1428 = vpack.c.b16 %v1352, %v1348
    %v1429 = vpack.c.b16 %v1353, %v1349
    %v1430 = vpack.c.b16 %v1354, %v1350
    %v1431 = vpack.c.b16 %v1355, %v1351
    %v1432 = vpack.c.b16 %v1360, %v1356
    %v1433 = vpack.c.b16 %v1361, %v1357
    %v1434 = vpack.c.b16 %v1362, %v1358
    %v1435 = vpack.c.b16 %v1363, %v1359
    %v1436 = vpack.c.b16 %v1368, %v1364
    %v1437 = vpack.c.b16 %v1369, %v1365
    %v1438 = vpack.c.b16 %v1370, %v1366
    %v1439 = vpack.c.b16 %v1371, %v1367
    %v1440 = vpack.c.b16 %v1376, %v1372
    %v1441 = vpack.c.b16 %v1377, %v1373
    %v1442 = vpack.c.b16 %v1378, %v1374
    %v1443 = vpack.c.b16 %v1379, %v1375
    %1508 = vmatpush.bf16.msra.mxu0 %v1408
    %1509 = vmatpush.bf16.msra.mxu0 %v1404
    %1510 = vmatpush.bf16.msra.mxu0 %v1400
    %1511 = vmatpush.bf16.msra.mxu0 %v1396
    %1512 = vmatpush.bf16.msra.mxu0 %v1392
    %1513 = vmatpush.bf16.msra.mxu0 %v1388
    %1514 = vmatpush.bf16.msra.mxu0 %v1384
    %1515 = vmatpush.bf16.msra.mxu0 %v1380
    %1516 = vmatmul.bf16.gmra.mxu0 %v1113
    %v1517 = vpop.f32.mrf.mxu0
    %v1518 = vadd.f32 %v1180, %v1517
    %v1519 = vpop.f32.mrf.mxu0
    %1520 = vdwg.mxu0
    %1521 = vmatpush.bf16.msra.mxu0 %v1440
    %1522 = vmatpush.bf16.msra.mxu0 %v1436
    %1523 = vmatpush.bf16.msra.mxu0 %v1432
    %1524 = vmatpush.bf16.msra.mxu0 %v1428
    %1525 = vmatpush.bf16.msra.mxu0 %v1424
    %1526 = vmatpush.bf16.msra.mxu0 %v1420
    %1527 = vmatpush.bf16.msra.mxu0 %v1416
    %1528 = vmatpush.bf16.msra.mxu0 %v1412
    %1529 = vmatmul.bf16.gmra.mxu0 %v1114
    %v1530 = vpop.f32.mrf.mxu0
    %v1531 = vadd.f32 %v1518, %v1530
    %v1532 = vpop.f32.mrf.mxu0
    %1533 = vdwg.mxu0
    %1534 = vmatpush.bf16.msra.mxu0 %v1409
    %1535 = vmatpush.bf16.msra.mxu0 %v1405
    %1536 = vmatpush.bf16.msra.mxu0 %v1401
    %1537 = vmatpush.bf16.msra.mxu0 %v1397
    %1538 = vmatpush.bf16.msra.mxu0 %v1393
    %1539 = vmatpush.bf16.msra.mxu0 %v1389
    %1540 = vmatpush.bf16.msra.mxu0 %v1385
    %1541 = vmatpush.bf16.msra.mxu0 %v1381
    %1542 = vmatmul.bf16.gmra.mxu0 %v1113
    %v1543 = vpop.f32.mrf.mxu0
    %v1544 = vadd.f32 %v1181, %v1543
    %v1545 = vpop.f32.mrf.mxu0
    %1546 = vdwg.mxu0
    %1547 = vmatpush.bf16.msra.mxu0 %v1441
    %1548 = vmatpush.bf16.msra.mxu0 %v1437
    %1549 = vmatpush.bf16.msra.mxu0 %v1433
    %1550 = vmatpush.bf16.msra.mxu0 %v1429
    %1551 = vmatpush.bf16.msra.mxu0 %v1425
    %1552 = vmatpush.bf16.msra.mxu0 %v1421
    %1553 = vmatpush.bf16.msra.mxu0 %v1417
    %1554 = vmatpush.bf16.msra.mxu0 %v1413
    %1555 = vmatmul.bf16.gmra.mxu0 %v1114
    %v1556 = vpop.f32.mrf.mxu0
    %v1557 = vadd.f32 %v1544, %v1556
    %v1558 = vpop.f32.mrf.mxu0
    %1559 = vdwg.mxu0
    %1560 = vmatpush.bf16.msra.mxu0 %v1410
    %1561 = vmatpush.bf16.msra.mxu0 %v1406
    %1562 = vmatpush.bf16.msra.mxu0 %v1402
    %1563 = vmatpush.bf16.msra.mxu0 %v1398
    %1564 = vmatpush.bf16.msra.mxu0 %v1394
    %1565 = vmatpush.bf16.msra.mxu0 %v1390
    %1566 = vmatpush.bf16.msra.mxu0 %v1386
    %1567 = vmatpush.bf16.msra.mxu0 %v1382
    %1568 = vmatmul.bf16.gmra.mxu0 %v1113
    %v1569 = vpop.f32.mrf.mxu0
    %v1570 = vadd.f32 %v1182, %v1569
    %v1571 = vpop.f32.mrf.mxu0
    %1572 = vdwg.mxu0
    %1573 = vmatpush.bf16.msra.mxu0 %v1442
    %1574 = vmatpush.bf16.msra.mxu0 %v1438
    %1575 = vmatpush.bf16.msra.mxu0 %v1434
    %1576 = vmatpush.bf16.msra.mxu0 %v1430
    %1577 = vmatpush.bf16.msra.mxu0 %v1426
    %1578 = vmatpush.bf16.msra.mxu0 %v1422
    %1579 = vmatpush.bf16.msra.mxu0 %v1418
    %1580 = vmatpush.bf16.msra.mxu0 %v1414
    %1581 = vmatmul.bf16.gmra.mxu0 %v1114
    %v1582 = vpop.f32.mrf.mxu0
    %v1583 = vadd.f32 %v1570, %v1582
    %v1584 = vpop.f32.mrf.mxu0
    %1585 = vdwg.mxu0
    %1586 = vmatpush.bf16.msra.mxu0 %v1411
    %1587 = vmatpush.bf16.msra.mxu0 %v1407
    %1588 = vmatpush.bf16.msra.mxu0 %v1403
    %1589 = vmatpush.bf16.msra.mxu0 %v1399
    %1590 = vmatpush.bf16.msra.mxu0 %v1395
    %1591 = vmatpush.bf16.msra.mxu0 %v1391
    %1592 = vmatpush.bf16.msra.mxu0 %v1387
    %1593 = vmatpush.bf16.msra.mxu0 %v1383
    %1594 = vmatmul.bf16.gmra.mxu0 %v1113
    %v1595 = vpop.f32.mrf.mxu0
    %v1596 = vadd.f32 %v1183, %v1595
    %v1597 = vpop.f32.mrf.mxu0
    %1598 = vdwg.mxu0
    %1599 = vmatpush.bf16.msra.mxu0 %v1443
    %1600 = vmatpush.bf16.msra.mxu0 %v1439
    %1601 = vmatpush.bf16.msra.mxu0 %v1435
    %1602 = vmatpush.bf16.msra.mxu0 %v1431
    %1603 = vmatpush.bf16.msra.mxu0 %v1427
    %1604 = vmatpush.bf16.msra.mxu0 %v1423
    %1605 = vmatpush.bf16.msra.mxu0 %v1419
    %1606 = vmatpush.bf16.msra.mxu0 %v1415
    %1607 = vmatmul.bf16.gmra.mxu0 %v1114
    %v1608 = vpop.f32.mrf.mxu0
    %v1609 = vadd.f32 %v1596, %v1608
    %v1610 = vpop.f32.mrf.mxu0
    %1611 = vdwg.mxu0
    %v1612 = vtanh.pop %v1531
    %v1613 = vtanh.pop %v1557
    %v1614 = vtanh.pop %v1583
    %v1615 = vtanh.pop %v1609
    %v1616 = vld [vmem:[%s10 + $0x7] ss:$0 sm:$0xff]
    %v1617 = vpack.c.bf16 %v1612, %v1612
    %v1618 = vpack.c.bf16 %v1613, %v1613
    %v1619 = vpack.c.bf16 %v1614, %v1614
    %v1620 = vpack.c.bf16 %v1615, %v1615
    %v1621 = vld [vmem:[%s8] sm:$0xf]
    %v1622 = vld [vmem:[%s8 + $0x4] sm:$0xf]
    %v1623 = vld [vmem:[%s8 + $0x8] sm:$0xf]
    %v1624 = vld [vmem:[%s8 + $0xc] sm:$0xf]
    %v1625 = vld [vmem:[%s8 + $0x10] sm:$0xf]
    %v1626 = vld [vmem:[%s8 + $0x14] sm:$0xf]
    %v1627 = vld [vmem:[%s8 + $0x18] sm:$0xf]
    %v1628 = vld [vmem:[%s8 + $0x1c] sm:$0xf]
    %v1629 = vld [vmem:[%s8 + $0x20] sm:$0xf]
    %v1630 = vld [vmem:[%s8 + $0x24] sm:$0xf]
    %v1631 = vld [vmem:[%s8 + $0x28] sm:$0xf]
    %v1632 = vld [vmem:[%s8 + $0x2c] sm:$0xf]
    %v1633 = vld [vmem:[%s8 + $0x30] sm:$0xf]
    %v1634 = vld [vmem:[%s8 + $0x34] sm:$0xf]
    %v1635 = vld [vmem:[%s8 + $0x38] sm:$0xf]
    %v1636 = vld [vmem:[%s8 + $0x3c] sm:$0xf]
    %v1637 = vld [vmem:[%s8 + $0x40] sm:$0xf]
    %v1638 = vld [vmem:[%s8 + $0x44] sm:$0xf]
    %v1639 = vld [vmem:[%s8 + $0x48] sm:$0xf]
    %v1640 = vld [vmem:[%s8 + $0x4c] sm:$0xf]
    %v1641 = vld [vmem:[%s8 + $0x50] sm:$0xf]
    %v1642 = vld [vmem:[%s8 + $0x54] sm:$0xf]
    %v1643 = vld [vmem:[%s8 + $0x58] sm:$0xf]
    %v1644 = vld [vmem:[%s8 + $0x5c] sm:$0xf]
    %v1645 = vld [vmem:[%s8 + $0x60] sm:$0xf]
    %v1646 = vld [vmem:[%s8 + $0x64] sm:$0xf]
    %v1647 = vld [vmem:[%s8 + $0x68] sm:$0xf]
    %v1648 = vld [vmem:[%s8 + $0x6c] sm:$0xf]
    %v1649 = vld [vmem:[%s8 + $0x70] sm:$0xf]
    %v1650 = vld [vmem:[%s8 + $0x74] sm:$0xf]
    %v1651 = vld [vmem:[%s8 + $0x78] sm:$0xf]
    %v1652 = vld [vmem:[%s8 + $0x7c] sm:$0xf]
    %v1653 = vld [vmem:[%s8 + $0x80] sm:$0xf]
    %v1654 = vld [vmem:[%s8 + $0x84] sm:$0xf]
    %v1655 = vld [vmem:[%s8 + $0x88] sm:$0xf]
    %v1656 = vld [vmem:[%s8 + $0x8c] sm:$0xf]
    %v1657 = vld [vmem:[%s8 + $0x90] sm:$0xf]
    %v1658 = vld [vmem:[%s8 + $0x94] sm:$0xf]
    %v1659 = vld [vmem:[%s8 + $0x98] sm:$0xf]
    %v1660 = vld [vmem:[%s8 + $0x9c] sm:$0xf]
    %v1661 = vld [vmem:[%s8 + $0xa0] sm:$0xf]
    %v1662 = vld [vmem:[%s8 + $0xa4] sm:$0xf]
    %v1663 = vld [vmem:[%s8 + $0xa8] sm:$0xf]
    %v1664 = vld [vmem:[%s8 + $0xac] sm:$0xf]
    %v1665 = vld [vmem:[%s8 + $0xb0] sm:$0xf]
    %v1666 = vld [vmem:[%s8 + $0xb4] sm:$0xf]
    %v1667 = vld [vmem:[%s8 + $0xb8] sm:$0xf]
    %v1668 = vld [vmem:[%s8 + $0xbc] sm:$0xf]
    %v1669 = vld [vmem:[%s8 + $0xc0] sm:$0xf]
    %v1670 = vld [vmem:[%s8 + $0xc4] sm:$0xf]
    %v1671 = vld [vmem:[%s8 + $0xc8] sm:$0xf]
    %v1672 = vld [vmem:[%s8 + $0xcc] sm:$0xf]
    %v1673 = vld [vmem:[%s8 + $0xd0] sm:$0xf]
    %v1674 = vld [vmem:[%s8 + $0xd4] sm:$0xf]
    %v1675 = vld [vmem:[%s8 + $0xd8] sm:$0xf]
    %v1676 = vld [vmem:[%s8 + $0xdc] sm:$0xf]
    %v1677 = vld [vmem:[%s8 + $0xe0] sm:$0xf]
    %v1678 = vld [vmem:[%s8 + $0xe4] sm:$0xf]
    %v1679 = vld [vmem:[%s8 + $0xe8] sm:$0xf]
    %v1680 = vld [vmem:[%s8 + $0xec] sm:$0xf]
    %v1681 = vld [vmem:[%s8 + $0xf0] sm:$0xf]
    %v1682 = vld [vmem:[%s8 + $0xf4] sm:$0xf]
    %v1683 = vld [vmem:[%s8 + $0xf8] sm:$0xf]
    %v1684 = vld [vmem:[%s8 + $0xfc] sm:$0xf]
    %v1749 = vunpack.c.l.b16 %v1621
    %v1750 = vunpack.c.l.b16 %v1622
    %v1751 = vunpack.c.l.b16 %v1623
    %v1752 = vunpack.c.l.b16 %v1624
    %v1753 = vunpack.c.l.b16 %v1625
    %v1754 = vunpack.c.l.b16 %v1626
    %v1755 = vunpack.c.l.b16 %v1627
    %v1756 = vunpack.c.l.b16 %v1628
    %v1757 = vunpack.c.l.b16 %v1629
    %v1758 = vunpack.c.l.b16 %v1630
    %v1759 = vunpack.c.l.b16 %v1631
    %v1760 = vunpack.c.l.b16 %v1632
    %v1761 = vunpack.c.l.b16 %v1633
    %v1762 = vunpack.c.l.b16 %v1634
    %v1763 = vunpack.c.l.b16 %v1635
    %v1764 = vunpack.c.l.b16 %v1636
    %v1765 = vunpack.c.l.b16 %v1637
    %v1766 = vunpack.c.l.b16 %v1638
    %v1767 = vunpack.c.l.b16 %v1639
    %v1768 = vunpack.c.l.b16 %v1640
    %v1769 = vunpack.c.l.b16 %v1641
    %v1770 = vunpack.c.l.b16 %v1642
    %v1771 = vunpack.c.l.b16 %v1643
    %v1772 = vunpack.c.l.b16 %v1644
    %v1773 = vunpack.c.l.b16 %v1645
    %v1774 = vunpack.c.l.b16 %v1646
    %v1775 = vunpack.c.l.b16 %v1647
    %v1776 = vunpack.c.l.b16 %v1648
    %v1777 = vunpack.c.l.b16 %v1649
    %v1778 = vunpack.c.l.b16 %v1650
    %v1779 = vunpack.c.l.b16 %v1651
    %v1780 = vunpack.c.l.b16 %v1652
    %v1781 = vunpack.c.l.b16 %v1653
    %v1782 = vunpack.c.l.b16 %v1654
    %v1783 = vunpack.c.l.b16 %v1655
    %v1784 = vunpack.c.l.b16 %v1656
    %v1785 = vunpack.c.l.b16 %v1657
    %v1786 = vunpack.c.l.b16 %v1658
    %v1787 = vunpack.c.l.b16 %v1659
    %v1788 = vunpack.c.l.b16 %v1660
    %v1789 = vunpack.c.l.b16 %v1661
    %v1790 = vunpack.c.l.b16 %v1662
    %v1791 = vunpack.c.l.b16 %v1663
    %v1792 = vunpack.c.l.b16 %v1664
    %v1793 = vunpack.c.l.b16 %v1665
    %v1794 = vunpack.c.l.b16 %v1666
    %v1795 = vunpack.c.l.b16 %v1667
    %v1796 = vunpack.c.l.b16 %v1668
    %v1797 = vunpack.c.l.b16 %v1669
    %v1798 = vunpack.c.l.b16 %v1670
    %v1799 = vunpack.c.l.b16 %v1671
    %v1800 = vunpack.c.l.b16 %v1672
    %v1801 = vunpack.c.l.b16 %v1673
    %v1802 = vunpack.c.l.b16 %v1674
    %v1803 = vunpack.c.l.b16 %v1675
    %v1804 = vunpack.c.l.b16 %v1676
    %v1805 = vunpack.c.l.b16 %v1677
    %v1806 = vunpack.c.l.b16 %v1678
    %v1807 = vunpack.c.l.b16 %v1679
    %v1808 = vunpack.c.l.b16 %v1680
    %v1809 = vunpack.c.l.b16 %v1681
    %v1810 = vunpack.c.l.b16 %v1682
    %v1811 = vunpack.c.l.b16 %v1683
    %v1812 = vunpack.c.l.b16 %v1684
    %v1813 = vpack.c.b16 %v1750, %v1749
    %v1814 = vpack.c.b16 %v1752, %v1751
    %v1815 = vpack.c.b16 %v1754, %v1753
    %v1816 = vpack.c.b16 %v1756, %v1755
    %v1817 = vpack.c.b16 %v1758, %v1757
    %v1818 = vpack.c.b16 %v1760, %v1759
    %v1819 = vpack.c.b16 %v1762, %v1761
    %v1820 = vpack.c.b16 %v1764, %v1763
    %v1821 = vpack.c.b16 %v1766, %v1765
    %v1822 = vpack.c.b16 %v1768, %v1767
    %v1823 = vpack.c.b16 %v1770, %v1769
    %v1824 = vpack.c.b16 %v1772, %v1771
    %v1825 = vpack.c.b16 %v1774, %v1773
    %v1826 = vpack.c.b16 %v1776, %v1775
    %v1827 = vpack.c.b16 %v1778, %v1777
    %v1828 = vpack.c.b16 %v1780, %v1779
    %v1829 = vpack.c.b16 %v1782, %v1781
    %v1830 = vpack.c.b16 %v1784, %v1783
    %v1831 = vpack.c.b16 %v1786, %v1785
    %v1832 = vpack.c.b16 %v1788, %v1787
    %v1833 = vpack.c.b16 %v1790, %v1789
    %v1834 = vpack.c.b16 %v1792, %v1791
    %v1835 = vpack.c.b16 %v1794, %v1793
    %v1836 = vpack.c.b16 %v1796, %v1795
    %v1837 = vpack.c.b16 %v1798, %v1797
    %v1838 = vpack.c.b16 %v1800, %v1799
    %v1839 = vpack.c.b16 %v1802, %v1801
    %v1840 = vpack.c.b16 %v1804, %v1803
    %v1841 = vpack.c.b16 %v1806, %v1805
    %v1842 = vpack.c.b16 %v1808, %v1807
    %v1843 = vpack.c.b16 %v1810, %v1809
    %v1844 = vpack.c.b16 %v1812, %v1811
    %1877 = vmatpush.bf16.msra.mxu0 %v1820
    %1878 = vmatpush.bf16.msra.mxu0 %v1819
    %1879 = vmatpush.bf16.msra.mxu0 %v1818
    %1880 = vmatpush.bf16.msra.mxu0 %v1817
    %1881 = vmatpush.bf16.msra.mxu0 %v1816
    %1882 = vmatpush.bf16.msra.mxu0 %v1815
    %1883 = vmatpush.bf16.msra.mxu0 %v1814
    %1884 = vmatpush.bf16.msra.mxu0 %v1813
    %1885 = vmatmul.bf16.gmra.mxu0 %v1617
    %v1886 = vpop.f32.mrf.mxu0
    %v1887 = vadd.f32 %v1616, %v1886
    %v1888 = vpop.f32.mrf.mxu0
    %1889 = vdwg.mxu0
    %1890 = vmatpush.bf16.msra.mxu0 %v1828
    %1891 = vmatpush.bf16.msra.mxu0 %v1827
    %1892 = vmatpush.bf16.msra.mxu0 %v1826
    %1893 = vmatpush.bf16.msra.mxu0 %v1825
    %1894 = vmatpush.bf16.msra.mxu0 %v1824
    %1895 = vmatpush.bf16.msra.mxu0 %v1823
    %1896 = vmatpush.bf16.msra.mxu0 %v1822
    %1897 = vmatpush.bf16.msra.mxu0 %v1821
    %1898 = vmatmul.bf16.gmra.mxu0 %v1618
    %v1899 = vpop.f32.mrf.mxu0
    %v1900 = vadd.f32 %v1887, %v1899
    %v1901 = vpop.f32.mrf.mxu0
    %1902 = vdwg.mxu0
    %1903 = vmatpush.bf16.msra.mxu0 %v1836
    %1904 = vmatpush.bf16.msra.mxu0 %v1835
    %1905 = vmatpush.bf16.msra.mxu0 %v1834
    %1906 = vmatpush.bf16.msra.mxu0 %v1833
    %1907 = vmatpush.bf16.msra.mxu0 %v1832
    %1908 = vmatpush.bf16.msra.mxu0 %v1831
    %1909 = vmatpush.bf16.msra.mxu0 %v1830
    %1910 = vmatpush.bf16.msra.mxu0 %v1829
    %1911 = vmatmul.bf16.gmra.mxu0 %v1619
    %v1912 = vpop.f32.mrf.mxu0
    %v1913 = vadd.f32 %v1900, %v1912
    %v1914 = vpop.f32.mrf.mxu0
    %1915 = vdwg.mxu0
    %1916 = vmatpush.bf16.msra.mxu0 %v1844
    %1917 = vmatpush.bf16.msra.mxu0 %v1843
    %1918 = vmatpush.bf16.msra.mxu0 %v1842
    %1919 = vmatpush.bf16.msra.mxu0 %v1841
    %1920 = vmatpush.bf16.msra.mxu0 %v1840
    %1921 = vmatpush.bf16.msra.mxu0 %v1839
    %1922 = vmatpush.bf16.msra.mxu0 %v1838
    %1923 = vmatpush.bf16.msra.mxu0 %v1837
    %1924 = vmatmul.bf16.gmra.mxu0 %v1620
    %v1925 = vpop.f32.mrf.mxu0
    %v1926 = vadd.f32 %v1913, %v1925
    %v1927 = vpop.f32.mrf.mxu0
    %1928 = vdwg.mxu0
    %v1929 = vld [vmem:[%s10 + $0x20] ss:$0 sm:$0xff]
    %v1930 = vpack.c.bf16 %v978, %v978
    %v1931 = vld [vmem:[%s9] sm:$0xf]
    %v1932 = vld [vmem:[%s9 + $0x4] sm:$0x1]
    %v1935 = vunpack.c.l.b16 %v1931
    %v1936 = vunpack.c.l.b16 %v1932
    %v1937 = vpack.c.b16 %v1936, %v1935
    %vm1938 = vcmask 80896
    %v1940 = vsel %vm1938, %v1930, 0
    %vm1942 = vcmask 1044480
    %v1944 = vsel %vm1942, %v1937, 0
    %1946 = vmatpush.bf16.msra.mxu0 0
    %1947 = vmatpush.bf16.msra.mxu0 0
    %1948 = vmatpush.bf16.msra.mxu0 0
    %1949 = vmatpush.bf16.msra.mxu0 0
    %1950 = vmatpush.bf16.msra.mxu0 0
    %1951 = vmatpush.bf16.msra.mxu0 0
    %1952 = vmatpush.bf16.msra.mxu0 0
    %1953 = vmatpush.bf16.msra.mxu0 %v1944
    %1954 = vmatmul.bf16.gmra.mxu0 %v1940
    %v1955 = vpop.f32.mrf.mxu0
    %v1956 = vadd.f32 %v1929, %v1955
    %v1957 = vpop.f32.mrf.mxu0
    %1958 = vdwg.mxu0
    %vm1959 = vcmask 39936
    %v1960 = vsel %vm1959, %v1956, -inf
    %1961 = vmax.xlane.f32.xlu0 %v1960
    %v1962 = vpop.xlane.xlu0 %1961
    %v1963 = vsub.f32 %v1956, %v1962
    %v1964 = vmul.f32 %v1963, 1.442695
    %v1965 = vpow.pop %v1964
    %v1966 = vsel %vm1959, %v1965, 0.0
    %1967 = vadd.xlane.f32.xlu0 %v1966
    %v1968 = vpop.xlane.xlu0 %1967
    %v1969 = vrcp.pop %v1968
    %v1970 = vmul.f32 %v1965, %v1969
    %1972 = vrot.lane.b32.xlu0 %v1970, 2
    %v1973 = vpop.permute.xlu0 %1972
    %1976 = vrot.lane.b32.xlu0 %v1926, 7
    %v1977 = vpop.permute.xlu0 %1976
    %v1979 = vsel %vm942, %v926, %v1973
    %vm1980 = vcmask 56320
    %v1981 = vsel %vm1980, %v1979, %v1977
    %vm1982 = vcmask 318464
    %v1983 = vsel %vm1982, %v1981, 0.0
    %1984 = vst [vmem:[%s11] sm:$0xff] %v1983
    // Predicated region
    $region54: #{autoencoder_gmm_forward.1} parent=1 // pred_check
      _
    $region55: #{autoencoder_gmm_forward.1} parent=1 // pred_check_branch
      %1986 = sbr.rel (0) target = $region57
    $region56: #{autoencoder_gmm_forward.1} parent=1 // pred_region
      _
    $region57: #{autoencoder_gmm_forward.1} parent=1 // pred_fallthru
      _
    // Predicated region
    $region58: #{autoencoder_gmm_forward.1} parent=1 // pred_check
      _
    $region59: #{autoencoder_gmm_forward.1} parent=1 // pred_check_branch
      %1988 = sbr.rel (0) target = $region61
    $region60: #{autoencoder_gmm_forward.1} parent=1 // pred_region
      _
    $region61: #{autoencoder_gmm_forward.1} parent=1 // pred_fallthru
      _
    %1989 = vsyncpa [#allocation3], 1
    %1990 = vsyncpa [#allocation5], 1

</llo_original>
